<compile_context>
chip_gen: v6e
topology: v6e:2x2x1
jax: 0.10.0
libtpu: 0.0.40
codegen_flags: <defaults>
</compile_context>

<pallas_src>
import jax
import jax.numpy as jnp
from jax.experimental import pallas as pl
from jax.experimental.pallas import tpu as pltpu

IN_FEATURES = 64 * 64   # 4096
OUT_FEATURES = 2
OUT_PAD = 128           # lane-dense output width (last dim multiple of 128)


def _round_up(n, m):
    return ((n + m - 1) // m) * m


def linear_sigmoid_kernel(x_ref, wt_ref, o_ref):
    # x_ref:  (TB, F)       streamed batch tile (VMEM)
    # wt_ref: (F, OUT_PAD)  resident bf16 weight (VMEM, constant index_map)
    # o_ref:  (TB, OUT_PAD) lane-dense output tile
    x_bf16 = x_ref[...].astype(jnp.bfloat16)       # bf16 MXU operands,
    y = jnp.dot(x_bf16, wt_ref[...],               # f32 accumulation
                preferred_element_type=jnp.float32)
    o_ref[...] = jax.nn.sigmoid(y).astype(o_ref.dtype)


def net_forward(x, weight, *, tb=1024):
    """x: (B, 4096) float32, weight: (2, 4096) float32 (PyTorch layout)."""
    B, F = x.shape
    assert F == IN_FEATURES
    out_f = weight.shape[0]
    assert out_f == OUT_FEATURES

    # Weight: transpose, cast to bf16, zero-pad columns to 128 (lane-dense
    # output block, unmasked stores).  ~1 MiB resident in VMEM.
    w_t = jnp.zeros((F, OUT_PAD), jnp.bfloat16).at[:, :out_f].set(
        weight.T.astype(jnp.bfloat16))

    # Batch tiling.  Ragged grid (no whole-array padding):
    #  * tiny batches: one block equal to the full batch dim,
    #  * otherwise: multiple of 8 (f32 sublane), capped so the grid has at
    #    least 2 steps (lets "parallel" shard across v7x's 2 TensorCores).
    if B <= 8:
        TB = B
    else:
        TB = min(tb, _round_up(pl.cdiv(B, 2), 8))
    grid = (pl.cdiv(B, TB),)

    cost = pl.CostEstimate(
        flops=2 * B * F * OUT_PAD,
        transcendentals=B * OUT_PAD,                    # sigmoid -> exp
        bytes_accessed=(B * F * x.dtype.itemsize        # x stream (dominant)
                        + F * OUT_PAD * 2               # bf16 weight
                        + B * OUT_PAD * 4),             # f32 output
    )

    out_padded = pl.pallas_call(
        linear_sigmoid_kernel,
        out_shape=jax.ShapeDtypeStruct((B, OUT_PAD), jnp.float32),
        grid_spec=pltpu.PrefetchScalarGridSpec(
            num_scalar_prefetch=0,
            grid=grid,
            in_specs=[
                pl.BlockSpec((TB, F), lambda i: (i, 0)),        # streamed x tiles
                pl.BlockSpec((F, OUT_PAD), lambda i: (0, 0)),   # resident weight
            ],
            out_specs=pl.BlockSpec((TB, OUT_PAD), lambda i: (i, 0)),
        ),
        compiler_params=pltpu.CompilerParams(
            dimension_semantics=("parallel",),      # shard tiles across TCs (v7x)
            vmem_limit_bytes=48 * 1024 * 1024,      # 2x16 MiB x + weight + out
        ),
        cost_estimate=cost,
    )(x, w_t)

    # Drop padded output columns (kernel output rows already match B exactly).
    return out_padded[:, :out_f]


if __name__ == "__main__":
    key = jax.random.PRNGKey(0)
    k_x, k_w = jax.random.split(key)

    # Deterministic parameter init mirroring nn.Linear default
    # (kaiming-uniform: U[-1/sqrt(fan_in), 1/sqrt(fan_in)]), no bias.
    bound = 1.0 / (IN_FEATURES ** 0.5)
    weight = jax.random.uniform(
        k_w, (OUT_FEATURES, IN_FEATURES), jnp.float32, minval=-bound, maxval=bound
    )

    # Small batch consistent with the module's expected input (B, 4096).
    B = 2
    x = jax.random.normal(k_x, (B, IN_FEATURES), jnp.float32)

    out = net_forward(x, weight)
    out = jax.block_until_ready(out)

    # Cross-check against a pure-JAX f32 reference (kernel uses bf16 MXU
    # operands with f32 accumulation -> relax tolerance accordingly).
    ref = jax.nn.sigmoid(x @ weight.T)
    assert out.shape == (B, OUT_FEATURES)
    assert jnp.all(jnp.isfinite(out))
    assert jnp.allclose(out, ref, atol=5e-3, rtol=0.0)

    print("KERNEL_OK")
</pallas_src>

<mosaic_0001>
module attributes {stable_mosaic.version = 11 : i64} {
  func.func @linear_sigmoid_kernel(%arg0: i32, %arg1: memref<2x4096xf32, #tpu.memory_space<vmem>>, %arg2: memref<4096x128xbf16, #tpu.memory_space<vmem>>, %arg3: memref<2x128xf32, #tpu.memory_space<vmem>>) attributes {dimension_semantics = [#tpu.dimension_semantics<parallel>], iteration_bounds = array<i64: 1>, scalar_prefetch = 0 : i64, scratch_operands = 0 : i64, tpu.core_type = #tpu.core_type<tc>, window_params = [{transform_indices = @transform_0, window_bounds = array<i64: 2, 4096>}, {pipeline_mode = #tpu.pipeline_mode<synchronous>, transform_indices = @transform_1, window_bounds = array<i64: 4096, 128>}, {transform_indices = @transform_2, window_bounds = array<i64: 2, 128>}]} {
    %c0 = arith.constant 0 : index
    %c0_0 = arith.constant 0 : index
    %0 = vector.load %arg1[%c0, %c0_0] : memref<2x4096xf32, #tpu.memory_space<vmem>>, vector<2x4096xf32>
    %1 = arith.truncf %0 : vector<2x4096xf32> to vector<2x4096xbf16>
    %c0_1 = arith.constant 0 : index
    %c0_2 = arith.constant 0 : index
    %2 = vector.load %arg2[%c0_1, %c0_2] : memref<4096x128xbf16, #tpu.memory_space<vmem>>, vector<4096x128xbf16>
    %cst = arith.constant dense<0.000000e+00> : vector<2x128xf32>
    %3 = tpu.matmul %1, %2, %cst {dimension_numbers = #tpu.dot_dimension_numbers<[1], [0], [0], [1], [0, 0, 1, 1], [], []>} : vector<2x4096xbf16>, vector<4096x128xbf16>, vector<2x128xf32> -> vector<2x128xf32>
    %4 = arith.negf %3 : vector<2x128xf32>
    %5 = math.exp %4 : vector<2x128xf32>
    %cst_3 = arith.constant 1.000000e+00 : f32
    %6 = vector.broadcast %cst_3 : f32 to vector<2x128xf32>
    %7 = arith.addf %6, %5 : vector<2x128xf32>
    %8 = arith.divf %6, %7 : vector<2x128xf32>
    %c0_4 = arith.constant 0 : index
    %c0_5 = arith.constant 0 : index
    %9 = vector.load %arg3[%c0_4, %c0_5] : memref<2x128xf32, #tpu.memory_space<vmem>>, vector<2x128xf32>
    tpu.vector_store %arg3[%c0_4, %c0_5], %8 {strides = array<i32>} : memref<2x128xf32, #tpu.memory_space<vmem>>, vector<2x128xf32>,
    return
  }
  func.func @transform_0(%arg0: i32) -> (i32, i32) {
    %c0_i32 = arith.constant 0 : i32
    %c0_i32_0 = arith.constant 0 : i32
    return %arg0, %c0_i32 : i32, i32
  }
  func.func @transform_1(%arg0: i32) -> (i32, i32) {
    %c0_i32 = arith.constant 0 : i32
    %c0_i32_0 = arith.constant 0 : i32
    %c0_i32_1 = arith.constant 0 : i32
    return %c0_i32, %c0_i32_0 : i32, i32
  }
  func.func @transform_2(%arg0: i32) -> (i32, i32) {
    %c0_i32 = arith.constant 0 : i32
    %c0_i32_0 = arith.constant 0 : i32
    return %arg0, %c0_i32 : i32, i32
  }
}

</mosaic_0001>

<llo_original>
// kernel: tpu_custom_call.1
$region0: #{tpu_custom_call.1}
  #allocation0 [shape = 'u32[]', space=smem, size = 0x4, offset = 0x4, fixed_abs, tag = 'smem constant byte address 0x4 - core index']
  #allocation1 [shape = 'u32[144,128]{1,0:T(1,128)}', space=vmem, size = 0x12000, scoped, tag = 'internal scratch']
  %s0 = inlined_call_operand.hbm [shape: f32[2,4096], index: 0, kind: input, shape index: {}]
  %s1 = inlined_call_operand.hbm [shape: bf16[4096,128], index: 1, kind: input, shape index: {}]
  %s2 = inlined_call_operand.hbm [shape: f32[2,128], index: 2, kind: output, shape index: {}]
  %s3 = sld [smem:[#allocation0]]
  $region26: #{tpu_custom_call.1} parent=0
    _
  %s5 = ssub.s32 1, %s3
  %s6 = scalar_select 0, %s5, %s3
  $region1: #{tpu_custom_call.1} parent=0
    #allocation2 [shape = 'u8[32768]{0}', space=vmem, size = 0x8000, scoped, tag = 'input window, operand 0, single buffered']
    #allocation3 [shape = 's32[1]{0}', space=sflag, size = 0x4, scoped, tag = 'scoped memory for tpu_custom_call.1']
    #allocation4 [shape = 's32[1]{0}', space=sflag, size = 0x4, scoped, tag = 'scoped memory for tpu_custom_call.1']
    #allocation5 [shape = 'u8[1048576]{0}', space=vmem, size = 0x100000, scoped, tag = 'input window, operand 1, single buffered']
    #allocation6 [shape = 's32[1]{0}', space=sflag, size = 0x4, scoped, tag = 'scoped memory for tpu_custom_call.1']
    #allocation7 [shape = 'u8[1024]{0}', space=vmem, size = 0x400, scoped, tag = 'output window, operand 0, single buffered']
    %7 = vsyncpa [#allocation3], 0
    %8 = vsyncpa [#allocation6], 0
    %9 = vsyncpa [#allocation4], 0
    // Predicated region
    $region2: #{tpu_custom_call.1} parent=1 // pred_check
      _
    $region3: #{tpu_custom_call.1} parent=1 // pred_check_branch
      %11 = sbr.rel (0) target = $region5
    $region4: #{tpu_custom_call.1} parent=1 // pred_region
      %s13 = ssub.s32 1024, 1024
      %14 = vsyncadd [#allocation3], %s13
      %s16 = sshll.u32 [#allocation2], 4
      %s17 = int_to_ptr.vmem [resolvable:$true] %s16
      %19 = dma.hbm_to_vmem [thread:$0]  %s0, 1024, %s17, [#allocation3]
    $region5: #{tpu_custom_call.1} parent=1 // pred_fallthru
      _
    // Predicated region
    $region6: #{tpu_custom_call.1} parent=1 // pred_check
      _
    $region7: #{tpu_custom_call.1} parent=1 // pred_check_branch
      %21 = sbr.rel (0) target = $region9
    $region8: #{tpu_custom_call.1} parent=1 // pred_region
      %s23 = ssub.s32 32768, 32768
      %24 = vsyncadd [#allocation6], %s23
      %s25 = sshll.u32 [#allocation5], 4
      %s26 = int_to_ptr.vmem [resolvable:$true] %s25
      %31 = dma.hbm_to_vmem [thread:$0]  %s1, 32768, %s26, [#allocation6], 64, 64, 4
    $region9: #{tpu_custom_call.1} parent=1 // pred_fallthru
      _
    // Predicated region
    $region10: #{tpu_custom_call.1} parent=1 // pred_check
      _
    $region11: #{tpu_custom_call.1} parent=1 // pred_check_branch
      %33 = sbr.rel (0) target = $region13
    $region12: #{tpu_custom_call.1} parent=1 // pred_region
      %34 = dma.done [#allocation3], 1024
    $region13: #{tpu_custom_call.1} parent=1 // pred_fallthru
      _
    // Predicated region
    $region14: #{tpu_custom_call.1} parent=1 // pred_check
      _
    $region15: #{tpu_custom_call.1} parent=1 // pred_check_branch
      %36 = sbr.rel (0) target = $region17
    $region16: #{tpu_custom_call.1} parent=1 // pred_region
      %37 = dma.done [#allocation6], 32768
    $region17: #{tpu_custom_call.1} parent=1 // pred_fallthru
      _
    %v39 = vld [vmem:[#allocation2] sm:$0xff]
    %v40 = vld [vmem:[#allocation2 + $0x8] sm:$0xff]
    %v41 = vld [vmem:[#allocation2 + $0x10] sm:$0xff]
    %v42 = vld [vmem:[#allocation2 + $0x18] sm:$0xff]
    %v43 = vld [vmem:[#allocation2 + $0x20] sm:$0xff]
    %v44 = vld [vmem:[#allocation2 + $0x28] sm:$0xff]
    %v45 = vld [vmem:[#allocation2 + $0x30] sm:$0xff]
    %v46 = vld [vmem:[#allocation2 + $0x38] sm:$0xff]
    %v55 = vcombine.high %v39, %v39
    %v57 = vunpack.c.l.s4 1983009808
    %v58 = vunpack.c.0.s8 %v57
    %v59 = vlaneseq
    %v60 = vshrl.u32 %v59, 7
    %v61 = vsub.s32 %v58, %v60
    %v62 = vrot.slane %v39, %v61
    %v64 = vunpack.c.l.s4 1983009808
    %v65 = vunpack.c.0.s8 %v64
    %v66 = vlaneseq
    %v67 = vshrl.u32 %v66, 7
    %v68 = vsub.s32 %v65, %v67
    %v69 = vrot.slane %v55, %v68
    %v70 = vcombine.high %v62, %v62
    %v71 = vcombine.high %v69, %v69
    %v72 = vcombine.high %v40, %v40
    %v74 = vunpack.c.l.s4 1983009808
    %v75 = vunpack.c.0.s8 %v74
    %v76 = vlaneseq
    %v77 = vshrl.u32 %v76, 7
    %v78 = vsub.s32 %v75, %v77
    %v79 = vrot.slane %v40, %v78
    %v81 = vunpack.c.l.s4 1983009808
    %v82 = vunpack.c.0.s8 %v81
    %v83 = vlaneseq
    %v84 = vshrl.u32 %v83, 7
    %v85 = vsub.s32 %v82, %v84
    %v86 = vrot.slane %v72, %v85
    %v87 = vcombine.high %v79, %v79
    %v88 = vcombine.high %v86, %v86
    %v89 = vcombine.high %v41, %v41
    %v91 = vunpack.c.l.s4 1983009808
    %v92 = vunpack.c.0.s8 %v91
    %v93 = vlaneseq
    %v94 = vshrl.u32 %v93, 7
    %v95 = vsub.s32 %v92, %v94
    %v96 = vrot.slane %v41, %v95
    %v98 = vunpack.c.l.s4 1983009808
    %v99 = vunpack.c.0.s8 %v98
    %v100 = vlaneseq
    %v101 = vshrl.u32 %v100, 7
    %v102 = vsub.s32 %v99, %v101
    %v103 = vrot.slane %v89, %v102
    %v104 = vcombine.high %v96, %v96
    %v105 = vcombine.high %v103, %v103
    %v106 = vcombine.high %v42, %v42
    %v108 = vunpack.c.l.s4 1983009808
    %v109 = vunpack.c.0.s8 %v108
    %v110 = vlaneseq
    %v111 = vshrl.u32 %v110, 7
    %v112 = vsub.s32 %v109, %v111
    %v113 = vrot.slane %v42, %v112
    %v115 = vunpack.c.l.s4 1983009808
    %v116 = vunpack.c.0.s8 %v115
    %v117 = vlaneseq
    %v118 = vshrl.u32 %v117, 7
    %v119 = vsub.s32 %v116, %v118
    %v120 = vrot.slane %v106, %v119
    %v121 = vcombine.high %v113, %v113
    %v122 = vcombine.high %v120, %v120
    %v123 = vcombine.high %v43, %v43
    %v125 = vunpack.c.l.s4 1983009808
    %v126 = vunpack.c.0.s8 %v125
    %v127 = vlaneseq
    %v128 = vshrl.u32 %v127, 7
    %v129 = vsub.s32 %v126, %v128
    %v130 = vrot.slane %v43, %v129
    %v132 = vunpack.c.l.s4 1983009808
    %v133 = vunpack.c.0.s8 %v132
    %v134 = vlaneseq
    %v135 = vshrl.u32 %v134, 7
    %v136 = vsub.s32 %v133, %v135
    %v137 = vrot.slane %v123, %v136
    %v138 = vcombine.high %v130, %v130
    %v139 = vcombine.high %v137, %v137
    %v140 = vcombine.high %v44, %v44
    %v142 = vunpack.c.l.s4 1983009808
    %v143 = vunpack.c.0.s8 %v142
    %v144 = vlaneseq
    %v145 = vshrl.u32 %v144, 7
    %v146 = vsub.s32 %v143, %v145
    %v147 = vrot.slane %v44, %v146
    %v149 = vunpack.c.l.s4 1983009808
    %v150 = vunpack.c.0.s8 %v149
    %v151 = vlaneseq
    %v152 = vshrl.u32 %v151, 7
    %v153 = vsub.s32 %v150, %v152
    %v154 = vrot.slane %v140, %v153
    %v155 = vcombine.high %v147, %v147
    %v156 = vcombine.high %v154, %v154
    %v157 = vcombine.high %v45, %v45
    %v159 = vunpack.c.l.s4 1983009808
    %v160 = vunpack.c.0.s8 %v159
    %v161 = vlaneseq
    %v162 = vshrl.u32 %v161, 7
    %v163 = vsub.s32 %v160, %v162
    %v164 = vrot.slane %v45, %v163
    %v166 = vunpack.c.l.s4 1983009808
    %v167 = vunpack.c.0.s8 %v166
    %v168 = vlaneseq
    %v169 = vshrl.u32 %v168, 7
    %v170 = vsub.s32 %v167, %v169
    %v171 = vrot.slane %v157, %v170
    %v172 = vcombine.high %v164, %v164
    %v173 = vcombine.high %v171, %v171
    %v174 = vcombine.high %v46, %v46
    %v176 = vunpack.c.l.s4 1983009808
    %v177 = vunpack.c.0.s8 %v176
    %v178 = vlaneseq
    %v179 = vshrl.u32 %v178, 7
    %v180 = vsub.s32 %v177, %v179
    %v181 = vrot.slane %v46, %v180
    %v183 = vunpack.c.l.s4 1983009808
    %v184 = vunpack.c.0.s8 %v183
    %v185 = vlaneseq
    %v186 = vshrl.u32 %v185, 7
    %v187 = vsub.s32 %v184, %v186
    %v188 = vrot.slane %v174, %v187
    %v189 = vcombine.high %v181, %v181
    %v190 = vcombine.high %v188, %v188
    %v223 = vpack.c.bf16 %v62, %v62
    %v224 = vpack.c.bf16 %v70, %v70
    %v225 = vpack.c.bf16 %v69, %v69
    %v226 = vpack.c.bf16 %v71, %v71
    %v227 = vpack.c.bf16 %v79, %v79
    %v228 = vpack.c.bf16 %v87, %v87
    %v229 = vpack.c.bf16 %v86, %v86
    %v230 = vpack.c.bf16 %v88, %v88
    %v231 = vpack.c.bf16 %v96, %v96
    %v232 = vpack.c.bf16 %v104, %v104
    %v233 = vpack.c.bf16 %v103, %v103
    %v234 = vpack.c.bf16 %v105, %v105
    %v235 = vpack.c.bf16 %v113, %v113
    %v236 = vpack.c.bf16 %v121, %v121
    %v237 = vpack.c.bf16 %v120, %v120
    %v238 = vpack.c.bf16 %v122, %v122
    %v239 = vpack.c.bf16 %v130, %v130
    %v240 = vpack.c.bf16 %v138, %v138
    %v241 = vpack.c.bf16 %v137, %v137
    %v242 = vpack.c.bf16 %v139, %v139
    %v243 = vpack.c.bf16 %v147, %v147
    %v244 = vpack.c.bf16 %v155, %v155
    %v245 = vpack.c.bf16 %v154, %v154
    %v246 = vpack.c.bf16 %v156, %v156
    %v247 = vpack.c.bf16 %v164, %v164
    %v248 = vpack.c.bf16 %v172, %v172
    %v249 = vpack.c.bf16 %v171, %v171
    %v250 = vpack.c.bf16 %v173, %v173
    %v251 = vpack.c.bf16 %v181, %v181
    %v252 = vpack.c.bf16 %v189, %v189
    %v253 = vpack.c.bf16 %v188, %v188
    %v254 = vpack.c.bf16 %v190, %v190
    %v255 = vld [vmem:[#allocation5] sm:$0xf]
    %v256 = vld [vmem:[#allocation5 + $0x4] sm:$0xf]
    %v257 = vld [vmem:[#allocation5 + $0x8] sm:$0xf]
    %v258 = vld [vmem:[#allocation5 + $0xc] sm:$0xf]
    %v259 = vld [vmem:[#allocation5 + $0x10] sm:$0xf]
    %v260 = vld [vmem:[#allocation5 + $0x14] sm:$0xf]
    %v261 = vld [vmem:[#allocation5 + $0x18] sm:$0xf]
    %v262 = vld [vmem:[#allocation5 + $0x1c] sm:$0xf]
    %v263 = vld [vmem:[#allocation5 + $0x20] sm:$0xf]
    %v264 = vld [vmem:[#allocation5 + $0x24] sm:$0xf]
    %v265 = vld [vmem:[#allocation5 + $0x28] sm:$0xf]
    %v266 = vld [vmem:[#allocation5 + $0x2c] sm:$0xf]
    %v267 = vld [vmem:[#allocation5 + $0x30] sm:$0xf]
    %v268 = vld [vmem:[#allocation5 + $0x34] sm:$0xf]
    %v269 = vld [vmem:[#allocation5 + $0x38] sm:$0xf]
    %v270 = vld [vmem:[#allocation5 + $0x3c] sm:$0xf]
    %v271 = vld [vmem:[#allocation5 + $0x40] sm:$0xf]
    %v272 = vld [vmem:[#allocation5 + $0x44] sm:$0xf]
    %v273 = vld [vmem:[#allocation5 + $0x48] sm:$0xf]
    %v274 = vld [vmem:[#allocation5 + $0x4c] sm:$0xf]
    %v275 = vld [vmem:[#allocation5 + $0x50] sm:$0xf]
    %v276 = vld [vmem:[#allocation5 + $0x54] sm:$0xf]
    %v277 = vld [vmem:[#allocation5 + $0x58] sm:$0xf]
    %v278 = vld [vmem:[#allocation5 + $0x5c] sm:$0xf]
    %v279 = vld [vmem:[#allocation5 + $0x60] sm:$0xf]
    %v280 = vld [vmem:[#allocation5 + $0x64] sm:$0xf]
    %v281 = vld [vmem:[#allocation5 + $0x68] sm:$0xf]
    %v282 = vld [vmem:[#allocation5 + $0x6c] sm:$0xf]
    %v283 = vld [vmem:[#allocation5 + $0x70] sm:$0xf]
    %v284 = vld [vmem:[#allocation5 + $0x74] sm:$0xf]
    %v285 = vld [vmem:[#allocation5 + $0x78] sm:$0xf]
    %v286 = vld [vmem:[#allocation5 + $0x7c] sm:$0xf]
    %v287 = vld [vmem:[#allocation5 + $0x80] sm:$0xf]
    %v288 = vld [vmem:[#allocation5 + $0x84] sm:$0xf]
    %v289 = vld [vmem:[#allocation5 + $0x88] sm:$0xf]
    %v290 = vld [vmem:[#allocation5 + $0x8c] sm:$0xf]
    %v291 = vld [vmem:[#allocation5 + $0x90] sm:$0xf]
    %v292 = vld [vmem:[#allocation5 + $0x94] sm:$0xf]
    %v293 = vld [vmem:[#allocation5 + $0x98] sm:$0xf]
    %v294 = vld [vmem:[#allocation5 + $0x9c] sm:$0xf]
    %v295 = vld [vmem:[#allocation5 + $0xa0] sm:$0xf]
    %v296 = vld [vmem:[#allocation5 + $0xa4] sm:$0xf]
    %v297 = vld [vmem:[#allocation5 + $0xa8] sm:$0xf]
    %v298 = vld [vmem:[#allocation5 + $0xac] sm:$0xf]
    %v299 = vld [vmem:[#allocation5 + $0xb0] sm:$0xf]
    %v300 = vld [vmem:[#allocation5 + $0xb4] sm:$0xf]
    %v301 = vld [vmem:[#allocation5 + $0xb8] sm:$0xf]
    %v302 = vld [vmem:[#allocation5 + $0xbc] sm:$0xf]
    %v303 = vld [vmem:[#allocation5 + $0xc0] sm:$0xf]
    %v304 = vld [vmem:[#allocation5 + $0xc4] sm:$0xf]
    %v305 = vld [vmem:[#allocation5 + $0xc8] sm:$0xf]
    %v306 = vld [vmem:[#allocation5 + $0xcc] sm:$0xf]
    %v307 = vld [vmem:[#allocation5 + $0xd0] sm:$0xf]
    %v308 = vld [vmem:[#allocation5 + $0xd4] sm:$0xf]
    %v309 = vld [vmem:[#allocation5 + $0xd8] sm:$0xf]
    %v310 = vld [vmem:[#allocation5 + $0xdc] sm:$0xf]
    %v311 = vld [vmem:[#allocation5 + $0xe0] sm:$0xf]
    %v312 = vld [vmem:[#allocation5 + $0xe4] sm:$0xf]
    %v313 = vld [vmem:[#allocation5 + $0xe8] sm:$0xf]
    %v314 = vld [vmem:[#allocation5 + $0xec] sm:$0xf]
    %v315 = vld [vmem:[#allocation5 + $0xf0] sm:$0xf]
    %v316 = vld [vmem:[#allocation5 + $0xf4] sm:$0xf]
    %v317 = vld [vmem:[#allocation5 + $0xf8] sm:$0xf]
    %v318 = vld [vmem:[#allocation5 + $0xfc] sm:$0xf]
    %v319 = vld [vmem:[#allocation5 + $0x100] sm:$0xf]
    %v320 = vld [vmem:[#allocation5 + $0x104] sm:$0xf]
    %v321 = vld [vmem:[#allocation5 + $0x108] sm:$0xf]
    %v322 = vld [vmem:[#allocation5 + $0x10c] sm:$0xf]
    %v323 = vld [vmem:[#allocation5 + $0x110] sm:$0xf]
    %v324 = vld [vmem:[#allocation5 + $0x114] sm:$0xf]
    %v325 = vld [vmem:[#allocation5 + $0x118] sm:$0xf]
    %v326 = vld [vmem:[#allocation5 + $0x11c] sm:$0xf]
    %v327 = vld [vmem:[#allocation5 + $0x120] sm:$0xf]
    %v328 = vld [vmem:[#allocation5 + $0x124] sm:$0xf]
    %v329 = vld [vmem:[#allocation5 + $0x128] sm:$0xf]
    %v330 = vld [vmem:[#allocation5 + $0x12c] sm:$0xf]
    %v331 = vld [vmem:[#allocation5 + $0x130] sm:$0xf]
    %v332 = vld [vmem:[#allocation5 + $0x134] sm:$0xf]
    %v333 = vld [vmem:[#allocation5 + $0x138] sm:$0xf]
    %v334 = vld [vmem:[#allocation5 + $0x13c] sm:$0xf]
    %v335 = vld [vmem:[#allocation5 + $0x140] sm:$0xf]
    %v336 = vld [vmem:[#allocation5 + $0x144] sm:$0xf]
    %v337 = vld [vmem:[#allocation5 + $0x148] sm:$0xf]
    %v338 = vld [vmem:[#allocation5 + $0x14c] sm:$0xf]
    %v339 = vld [vmem:[#allocation5 + $0x150] sm:$0xf]
    %v340 = vld [vmem:[#allocation5 + $0x154] sm:$0xf]
    %v341 = vld [vmem:[#allocation5 + $0x158] sm:$0xf]
    %v342 = vld [vmem:[#allocation5 + $0x15c] sm:$0xf]
    %v343 = vld [vmem:[#allocation5 + $0x160] sm:$0xf]
    %v344 = vld [vmem:[#allocation5 + $0x164] sm:$0xf]
    %v345 = vld [vmem:[#allocation5 + $0x168] sm:$0xf]
    %v346 = vld [vmem:[#allocation5 + $0x16c] sm:$0xf]
    %v347 = vld [vmem:[#allocation5 + $0x170] sm:$0xf]
    %v348 = vld [vmem:[#allocation5 + $0x174] sm:$0xf]
    %v349 = vld [vmem:[#allocation5 + $0x178] sm:$0xf]
    %v350 = vld [vmem:[#allocation5 + $0x17c] sm:$0xf]
    %v351 = vld [vmem:[#allocation5 + $0x180] sm:$0xf]
    %v352 = vld [vmem:[#allocation5 + $0x184] sm:$0xf]
    %v353 = vld [vmem:[#allocation5 + $0x188] sm:$0xf]
    %v354 = vld [vmem:[#allocation5 + $0x18c] sm:$0xf]
    %v355 = vld [vmem:[#allocation5 + $0x190] sm:$0xf]
    %v356 = vld [vmem:[#allocation5 + $0x194] sm:$0xf]
    %v357 = vld [vmem:[#allocation5 + $0x198] sm:$0xf]
    %v358 = vld [vmem:[#allocation5 + $0x19c] sm:$0xf]
    %v359 = vld [vmem:[#allocation5 + $0x1a0] sm:$0xf]
    %v360 = vld [vmem:[#allocation5 + $0x1a4] sm:$0xf]
    %v361 = vld [vmem:[#allocation5 + $0x1a8] sm:$0xf]
    %v362 = vld [vmem:[#allocation5 + $0x1ac] sm:$0xf]
    %v363 = vld [vmem:[#allocation5 + $0x1b0] sm:$0xf]
    %v364 = vld [vmem:[#allocation5 + $0x1b4] sm:$0xf]
    %v365 = vld [vmem:[#allocation5 + $0x1b8] sm:$0xf]
    %v366 = vld [vmem:[#allocation5 + $0x1bc] sm:$0xf]
    %v367 = vld [vmem:[#allocation5 + $0x1c0] sm:$0xf]
    %v368 = vld [vmem:[#allocation5 + $0x1c4] sm:$0xf]
    %v369 = vld [vmem:[#allocation5 + $0x1c8] sm:$0xf]
    %v370 = vld [vmem:[#allocation5 + $0x1cc] sm:$0xf]
    %v371 = vld [vmem:[#allocation5 + $0x1d0] sm:$0xf]
    %v372 = vld [vmem:[#allocation5 + $0x1d4] sm:$0xf]
    %v373 = vld [vmem:[#allocation5 + $0x1d8] sm:$0xf]
    %v374 = vld [vmem:[#allocation5 + $0x1dc] sm:$0xf]
    %v375 = vld [vmem:[#allocation5 + $0x1e0] sm:$0xf]
    %v376 = vld [vmem:[#allocation5 + $0x1e4] sm:$0xf]
    %v377 = vld [vmem:[#allocation5 + $0x1e8] sm:$0xf]
    %v378 = vld [vmem:[#allocation5 + $0x1ec] sm:$0xf]
    %v379 = vld [vmem:[#allocation5 + $0x1f0] sm:$0xf]
    %v380 = vld [vmem:[#allocation5 + $0x1f4] sm:$0xf]
    %v381 = vld [vmem:[#allocation5 + $0x1f8] sm:$0xf]
    %v382 = vld [vmem:[#allocation5 + $0x1fc] sm:$0xf]
    %v383 = vld [vmem:[#allocation5 + $0x200] sm:$0xf]
    %v384 = vld [vmem:[#allocation5 + $0x204] sm:$0xf]
    %v385 = vld [vmem:[#allocation5 + $0x208] sm:$0xf]
    %v386 = vld [vmem:[#allocation5 + $0x20c] sm:$0xf]
    %v387 = vld [vmem:[#allocation5 + $0x210] sm:$0xf]
    %v388 = vld [vmem:[#allocation5 + $0x214] sm:$0xf]
    %v389 = vld [vmem:[#allocation5 + $0x218] sm:$0xf]
    %v390 = vld [vmem:[#allocation5 + $0x21c] sm:$0xf]
    %v391 = vld [vmem:[#allocation5 + $0x220] sm:$0xf]
    %v392 = vld [vmem:[#allocation5 + $0x224] sm:$0xf]
    %v393 = vld [vmem:[#allocation5 + $0x228] sm:$0xf]
    %v394 = vld [vmem:[#allocation5 + $0x22c] sm:$0xf]
    %v395 = vld [vmem:[#allocation5 + $0x230] sm:$0xf]
    %v396 = vld [vmem:[#allocation5 + $0x234] sm:$0xf]
    %v397 = vld [vmem:[#allocation5 + $0x238] sm:$0xf]
    %v398 = vld [vmem:[#allocation5 + $0x23c] sm:$0xf]
    %v399 = vld [vmem:[#allocation5 + $0x240] sm:$0xf]
    %v400 = vld [vmem:[#allocation5 + $0x244] sm:$0xf]
    %v401 = vld [vmem:[#allocation5 + $0x248] sm:$0xf]
    %v402 = vld [vmem:[#allocation5 + $0x24c] sm:$0xf]
    %v403 = vld [vmem:[#allocation5 + $0x250] sm:$0xf]
    %v404 = vld [vmem:[#allocation5 + $0x254] sm:$0xf]
    %v405 = vld [vmem:[#allocation5 + $0x258] sm:$0xf]
    %v406 = vld [vmem:[#allocation5 + $0x25c] sm:$0xf]
    %v407 = vld [vmem:[#allocation5 + $0x260] sm:$0xf]
    %v408 = vld [vmem:[#allocation5 + $0x264] sm:$0xf]
    %v409 = vld [vmem:[#allocation5 + $0x268] sm:$0xf]
    %v410 = vld [vmem:[#allocation5 + $0x26c] sm:$0xf]
    %v411 = vld [vmem:[#allocation5 + $0x270] sm:$0xf]
    %v412 = vld [vmem:[#allocation5 + $0x274] sm:$0xf]
    %v413 = vld [vmem:[#allocation5 + $0x278] sm:$0xf]
    %v414 = vld [vmem:[#allocation5 + $0x27c] sm:$0xf]
    %v415 = vld [vmem:[#allocation5 + $0x280] sm:$0xf]
    %v416 = vld [vmem:[#allocation5 + $0x284] sm:$0xf]
    %v417 = vld [vmem:[#allocation5 + $0x288] sm:$0xf]
    %v418 = vld [vmem:[#allocation5 + $0x28c] sm:$0xf]
    %v419 = vld [vmem:[#allocation5 + $0x290] sm:$0xf]
    %v420 = vld [vmem:[#allocation5 + $0x294] sm:$0xf]
    %v421 = vld [vmem:[#allocation5 + $0x298] sm:$0xf]
    %v422 = vld [vmem:[#allocation5 + $0x29c] sm:$0xf]
    %v423 = vld [vmem:[#allocation5 + $0x2a0] sm:$0xf]
    %v424 = vld [vmem:[#allocation5 + $0x2a4] sm:$0xf]
    %v425 = vld [vmem:[#allocation5 + $0x2a8] sm:$0xf]
    %v426 = vld [vmem:[#allocation5 + $0x2ac] sm:$0xf]
    %v427 = vld [vmem:[#allocation5 + $0x2b0] sm:$0xf]
    %v428 = vld [vmem:[#allocation5 + $0x2b4] sm:$0xf]
    %v429 = vld [vmem:[#allocation5 + $0x2b8] sm:$0xf]
    %v430 = vld [vmem:[#allocation5 + $0x2bc] sm:$0xf]
    %v431 = vld [vmem:[#allocation5 + $0x2c0] sm:$0xf]
    %v432 = vld [vmem:[#allocation5 + $0x2c4] sm:$0xf]
    %v433 = vld [vmem:[#allocation5 + $0x2c8] sm:$0xf]
    %v434 = vld [vmem:[#allocation5 + $0x2cc] sm:$0xf]
    %v435 = vld [vmem:[#allocation5 + $0x2d0] sm:$0xf]
    %v436 = vld [vmem:[#allocation5 + $0x2d4] sm:$0xf]
    %v437 = vld [vmem:[#allocation5 + $0x2d8] sm:$0xf]
    %v438 = vld [vmem:[#allocation5 + $0x2dc] sm:$0xf]
    %v439 = vld [vmem:[#allocation5 + $0x2e0] sm:$0xf]
    %v440 = vld [vmem:[#allocation5 + $0x2e4] sm:$0xf]
    %v441 = vld [vmem:[#allocation5 + $0x2e8] sm:$0xf]
    %v442 = vld [vmem:[#allocation5 + $0x2ec] sm:$0xf]
    %v443 = vld [vmem:[#allocation5 + $0x2f0] sm:$0xf]
    %v444 = vld [vmem:[#allocation5 + $0x2f4] sm:$0xf]
    %v445 = vld [vmem:[#allocation5 + $0x2f8] sm:$0xf]
    %v446 = vld [vmem:[#allocation5 + $0x2fc] sm:$0xf]
    %v447 = vld [vmem:[#allocation5 + $0x300] sm:$0xf]
    %v448 = vld [vmem:[#allocation5 + $0x304] sm:$0xf]
    %v449 = vld [vmem:[#allocation5 + $0x308] sm:$0xf]
    %v450 = vld [vmem:[#allocation5 + $0x30c] sm:$0xf]
    %v451 = vld [vmem:[#allocation5 + $0x310] sm:$0xf]
    %v452 = vld [vmem:[#allocation5 + $0x314] sm:$0xf]
    %v453 = vld [vmem:[#allocation5 + $0x318] sm:$0xf]
    %v454 = vld [vmem:[#allocation5 + $0x31c] sm:$0xf]
    %v455 = vld [vmem:[#allocation5 + $0x320] sm:$0xf]
    %v456 = vld [vmem:[#allocation5 + $0x324] sm:$0xf]
    %v457 = vld [vmem:[#allocation5 + $0x328] sm:$0xf]
    %v458 = vld [vmem:[#allocation5 + $0x32c] sm:$0xf]
    %v459 = vld [vmem:[#allocation5 + $0x330] sm:$0xf]
    %v460 = vld [vmem:[#allocation5 + $0x334] sm:$0xf]
    %v461 = vld [vmem:[#allocation5 + $0x338] sm:$0xf]
    %v462 = vld [vmem:[#allocation5 + $0x33c] sm:$0xf]
    %v463 = vld [vmem:[#allocation5 + $0x340] sm:$0xf]
    %v464 = vld [vmem:[#allocation5 + $0x344] sm:$0xf]
    %v465 = vld [vmem:[#allocation5 + $0x348] sm:$0xf]
    %v466 = vld [vmem:[#allocation5 + $0x34c] sm:$0xf]
    %v467 = vld [vmem:[#allocation5 + $0x350] sm:$0xf]
    %v468 = vld [vmem:[#allocation5 + $0x354] sm:$0xf]
    %v469 = vld [vmem:[#allocation5 + $0x358] sm:$0xf]
    %v470 = vld [vmem:[#allocation5 + $0x35c] sm:$0xf]
    %v471 = vld [vmem:[#allocation5 + $0x360] sm:$0xf]
    %v472 = vld [vmem:[#allocation5 + $0x364] sm:$0xf]
    %v473 = vld [vmem:[#allocation5 + $0x368] sm:$0xf]
    %v474 = vld [vmem:[#allocation5 + $0x36c] sm:$0xf]
    %v475 = vld [vmem:[#allocation5 + $0x370] sm:$0xf]
    %v476 = vld [vmem:[#allocation5 + $0x374] sm:$0xf]
    %v477 = vld [vmem:[#allocation5 + $0x378] sm:$0xf]
    %v478 = vld [vmem:[#allocation5 + $0x37c] sm:$0xf]
    %v479 = vld [vmem:[#allocation5 + $0x380] sm:$0xf]
    %v480 = vld [vmem:[#allocation5 + $0x384] sm:$0xf]
    %v481 = vld [vmem:[#allocation5 + $0x388] sm:$0xf]
    %v482 = vld [vmem:[#allocation5 + $0x38c] sm:$0xf]
    %v483 = vld [vmem:[#allocation5 + $0x390] sm:$0xf]
    %v484 = vld [vmem:[#allocation5 + $0x394] sm:$0xf]
    %v485 = vld [vmem:[#allocation5 + $0x398] sm:$0xf]
    %v486 = vld [vmem:[#allocation5 + $0x39c] sm:$0xf]
    %v487 = vld [vmem:[#allocation5 + $0x3a0] sm:$0xf]
    %v488 = vld [vmem:[#allocation5 + $0x3a4] sm:$0xf]
    %v489 = vld [vmem:[#allocation5 + $0x3a8] sm:$0xf]
    %v490 = vld [vmem:[#allocation5 + $0x3ac] sm:$0xf]
    %v491 = vld [vmem:[#allocation5 + $0x3b0] sm:$0xf]
    %v492 = vld [vmem:[#allocation5 + $0x3b4] sm:$0xf]
    %v493 = vld [vmem:[#allocation5 + $0x3b8] sm:$0xf]
    %v494 = vld [vmem:[#allocation5 + $0x3bc] sm:$0xf]
    %v495 = vld [vmem:[#allocation5 + $0x3c0] sm:$0xf]
    %v496 = vld [vmem:[#allocation5 + $0x3c4] sm:$0xf]
    %v497 = vld [vmem:[#allocation5 + $0x3c8] sm:$0xf]
    %v498 = vld [vmem:[#allocation5 + $0x3cc] sm:$0xf]
    %v499 = vld [vmem:[#allocation5 + $0x3d0] sm:$0xf]
    %v500 = vld [vmem:[#allocation5 + $0x3d4] sm:$0xf]
    %v501 = vld [vmem:[#allocation5 + $0x3d8] sm:$0xf]
    %v502 = vld [vmem:[#allocation5 + $0x3dc] sm:$0xf]
    %v503 = vld [vmem:[#allocation5 + $0x3e0] sm:$0xf]
    %v504 = vld [vmem:[#allocation5 + $0x3e4] sm:$0xf]
    %v505 = vld [vmem:[#allocation5 + $0x3e8] sm:$0xf]
    %v506 = vld [vmem:[#allocation5 + $0x3ec] sm:$0xf]
    %v507 = vld [vmem:[#allocation5 + $0x3f0] sm:$0xf]
    %v508 = vld [vmem:[#allocation5 + $0x3f4] sm:$0xf]
    %v509 = vld [vmem:[#allocation5 + $0x3f8] sm:$0xf]
    %v510 = vld [vmem:[#allocation5 + $0x3fc] sm:$0xf]
    %v511 = vld [vmem:[#allocation5 + $0x400] sm:$0xf]
    %v512 = vld [vmem:[#allocation5 + $0x404] sm:$0xf]
    %v513 = vld [vmem:[#allocation5 + $0x408] sm:$0xf]
    %v514 = vld [vmem:[#allocation5 + $0x40c] sm:$0xf]
    %v515 = vld [vmem:[#allocation5 + $0x410] sm:$0xf]
    %v516 = vld [vmem:[#allocation5 + $0x414] sm:$0xf]
    %v517 = vld [vmem:[#allocation5 + $0x418] sm:$0xf]
    %v518 = vld [vmem:[#allocation5 + $0x41c] sm:$0xf]
    %v519 = vld [vmem:[#allocation5 + $0x420] sm:$0xf]
    %v520 = vld [vmem:[#allocation5 + $0x424] sm:$0xf]
    %v521 = vld [vmem:[#allocation5 + $0x428] sm:$0xf]
    %v522 = vld [vmem:[#allocation5 + $0x42c] sm:$0xf]
    %v523 = vld [vmem:[#allocation5 + $0x430] sm:$0xf]
    %v524 = vld [vmem:[#allocation5 + $0x434] sm:$0xf]
    %v525 = vld [vmem:[#allocation5 + $0x438] sm:$0xf]
    %v526 = vld [vmem:[#allocation5 + $0x43c] sm:$0xf]
    %v527 = vld [vmem:[#allocation5 + $0x440] sm:$0xf]
    %v528 = vld [vmem:[#allocation5 + $0x444] sm:$0xf]
    %v529 = vld [vmem:[#allocation5 + $0x448] sm:$0xf]
    %v530 = vld [vmem:[#allocation5 + $0x44c] sm:$0xf]
    %v531 = vld [vmem:[#allocation5 + $0x450] sm:$0xf]
    %v532 = vld [vmem:[#allocation5 + $0x454] sm:$0xf]
    %v533 = vld [vmem:[#allocation5 + $0x458] sm:$0xf]
    %v534 = vld [vmem:[#allocation5 + $0x45c] sm:$0xf]
    %v535 = vld [vmem:[#allocation5 + $0x460] sm:$0xf]
    %v536 = vld [vmem:[#allocation5 + $0x464] sm:$0xf]
    %v537 = vld [vmem:[#allocation5 + $0x468] sm:$0xf]
    %v538 = vld [vmem:[#allocation5 + $0x46c] sm:$0xf]
    %v539 = vld [vmem:[#allocation5 + $0x470] sm:$0xf]
    %v540 = vld [vmem:[#allocation5 + $0x474] sm:$0xf]
    %v541 = vld [vmem:[#allocation5 + $0x478] sm:$0xf]
    %v542 = vld [vmem:[#allocation5 + $0x47c] sm:$0xf]
    %v543 = vld [vmem:[#allocation5 + $0x480] sm:$0xf]
    %v544 = vld [vmem:[#allocation5 + $0x484] sm:$0xf]
    %v545 = vld [vmem:[#allocation5 + $0x488] sm:$0xf]
    %v546 = vld [vmem:[#allocation5 + $0x48c] sm:$0xf]
    %v547 = vld [vmem:[#allocation5 + $0x490] sm:$0xf]
    %v548 = vld [vmem:[#allocation5 + $0x494] sm:$0xf]
    %v549 = vld [vmem:[#allocation5 + $0x498] sm:$0xf]
    %v550 = vld [vmem:[#allocation5 + $0x49c] sm:$0xf]
    %v551 = vld [vmem:[#allocation5 + $0x4a0] sm:$0xf]
    %v552 = vld [vmem:[#allocation5 + $0x4a4] sm:$0xf]
    %v553 = vld [vmem:[#allocation5 + $0x4a8] sm:$0xf]
    %v554 = vld [vmem:[#allocation5 + $0x4ac] sm:$0xf]
    %v555 = vld [vmem:[#allocation5 + $0x4b0] sm:$0xf]
    %v556 = vld [vmem:[#allocation5 + $0x4b4] sm:$0xf]
    %v557 = vld [vmem:[#allocation5 + $0x4b8] sm:$0xf]
    %v558 = vld [vmem:[#allocation5 + $0x4bc] sm:$0xf]
    %v559 = vld [vmem:[#allocation5 + $0x4c0] sm:$0xf]
    %v560 = vld [vmem:[#allocation5 + $0x4c4] sm:$0xf]
    %v561 = vld [vmem:[#allocation5 + $0x4c8] sm:$0xf]
    %v562 = vld [vmem:[#allocation5 + $0x4cc] sm:$0xf]
    %v563 = vld [vmem:[#allocation5 + $0x4d0] sm:$0xf]
    %v564 = vld [vmem:[#allocation5 + $0x4d4] sm:$0xf]
    %v565 = vld [vmem:[#allocation5 + $0x4d8] sm:$0xf]
    %v566 = vld [vmem:[#allocation5 + $0x4dc] sm:$0xf]
    %v567 = vld [vmem:[#allocation5 + $0x4e0] sm:$0xf]
    %v568 = vld [vmem:[#allocation5 + $0x4e4] sm:$0xf]
    %v569 = vld [vmem:[#allocation5 + $0x4e8] sm:$0xf]
    %v570 = vld [vmem:[#allocation5 + $0x4ec] sm:$0xf]
    %v571 = vld [vmem:[#allocation5 + $0x4f0] sm:$0xf]
    %v572 = vld [vmem:[#allocation5 + $0x4f4] sm:$0xf]
    %v573 = vld [vmem:[#allocation5 + $0x4f8] sm:$0xf]
    %v574 = vld [vmem:[#allocation5 + $0x4fc] sm:$0xf]
    %v575 = vld [vmem:[#allocation5 + $0x500] sm:$0xf]
    %v576 = vld [vmem:[#allocation5 + $0x504] sm:$0xf]
    %v577 = vld [vmem:[#allocation5 + $0x508] sm:$0xf]
    %v578 = vld [vmem:[#allocation5 + $0x50c] sm:$0xf]
    %v579 = vld [vmem:[#allocation5 + $0x510] sm:$0xf]
    %v580 = vld [vmem:[#allocation5 + $0x514] sm:$0xf]
    %v581 = vld [vmem:[#allocation5 + $0x518] sm:$0xf]
    %v582 = vld [vmem:[#allocation5 + $0x51c] sm:$0xf]
    %v583 = vld [vmem:[#allocation5 + $0x520] sm:$0xf]
    %v584 = vld [vmem:[#allocation5 + $0x524] sm:$0xf]
    %v585 = vld [vmem:[#allocation5 + $0x528] sm:$0xf]
    %v586 = vld [vmem:[#allocation5 + $0x52c] sm:$0xf]
    %v587 = vld [vmem:[#allocation5 + $0x530] sm:$0xf]
    %v588 = vld [vmem:[#allocation5 + $0x534] sm:$0xf]
    %v589 = vld [vmem:[#allocation5 + $0x538] sm:$0xf]
    %v590 = vld [vmem:[#allocation5 + $0x53c] sm:$0xf]
    %v591 = vld [vmem:[#allocation5 + $0x540] sm:$0xf]
    %v592 = vld [vmem:[#allocation5 + $0x544] sm:$0xf]
    %v593 = vld [vmem:[#allocation5 + $0x548] sm:$0xf]
    %v594 = vld [vmem:[#allocation5 + $0x54c] sm:$0xf]
    %v595 = vld [vmem:[#allocation5 + $0x550] sm:$0xf]
    %v596 = vld [vmem:[#allocation5 + $0x554] sm:$0xf]
    %v597 = vld [vmem:[#allocation5 + $0x558] sm:$0xf]
    %v598 = vld [vmem:[#allocation5 + $0x55c] sm:$0xf]
    %v599 = vld [vmem:[#allocation5 + $0x560] sm:$0xf]
    %v600 = vld [vmem:[#allocation5 + $0x564] sm:$0xf]
    %v601 = vld [vmem:[#allocation5 + $0x568] sm:$0xf]
    %v602 = vld [vmem:[#allocation5 + $0x56c] sm:$0xf]
    %v603 = vld [vmem:[#allocation5 + $0x570] sm:$0xf]
    %v604 = vld [vmem:[#allocation5 + $0x574] sm:$0xf]
    %v605 = vld [vmem:[#allocation5 + $0x578] sm:$0xf]
    %v606 = vld [vmem:[#allocation5 + $0x57c] sm:$0xf]
    %v607 = vld [vmem:[#allocation5 + $0x580] sm:$0xf]
    %v608 = vld [vmem:[#allocation5 + $0x584] sm:$0xf]
    %v609 = vld [vmem:[#allocation5 + $0x588] sm:$0xf]
    %v610 = vld [vmem:[#allocation5 + $0x58c] sm:$0xf]
    %v611 = vld [vmem:[#allocation5 + $0x590] sm:$0xf]
    %v612 = vld [vmem:[#allocation5 + $0x594] sm:$0xf]
    %v613 = vld [vmem:[#allocation5 + $0x598] sm:$0xf]
    %v614 = vld [vmem:[#allocation5 + $0x59c] sm:$0xf]
    %v615 = vld [vmem:[#allocation5 + $0x5a0] sm:$0xf]
    %v616 = vld [vmem:[#allocation5 + $0x5a4] sm:$0xf]
    %v617 = vld [vmem:[#allocation5 + $0x5a8] sm:$0xf]
    %v618 = vld [vmem:[#allocation5 + $0x5ac] sm:$0xf]
    %v619 = vld [vmem:[#allocation5 + $0x5b0] sm:$0xf]
    %v620 = vld [vmem:[#allocation5 + $0x5b4] sm:$0xf]
    %v621 = vld [vmem:[#allocation5 + $0x5b8] sm:$0xf]
    %v622 = vld [vmem:[#allocation5 + $0x5bc] sm:$0xf]
    %v623 = vld [vmem:[#allocation5 + $0x5c0] sm:$0xf]
    %v624 = vld [vmem:[#allocation5 + $0x5c4] sm:$0xf]
    %v625 = vld [vmem:[#allocation5 + $0x5c8] sm:$0xf]
    %v626 = vld [vmem:[#allocation5 + $0x5cc] sm:$0xf]
    %v627 = vld [vmem:[#allocation5 + $0x5d0] sm:$0xf]
    %v628 = vld [vmem:[#allocation5 + $0x5d4] sm:$0xf]
    %v629 = vld [vmem:[#allocation5 + $0x5d8] sm:$0xf]
    %v630 = vld [vmem:[#allocation5 + $0x5dc] sm:$0xf]
    %v631 = vld [vmem:[#allocation5 + $0x5e0] sm:$0xf]
    %v632 = vld [vmem:[#allocation5 + $0x5e4] sm:$0xf]
    %v633 = vld [vmem:[#allocation5 + $0x5e8] sm:$0xf]
    %v634 = vld [vmem:[#allocation5 + $0x5ec] sm:$0xf]
    %v635 = vld [vmem:[#allocation5 + $0x5f0] sm:$0xf]
    %v636 = vld [vmem:[#allocation5 + $0x5f4] sm:$0xf]
    %v637 = vld [vmem:[#allocation5 + $0x5f8] sm:$0xf]
    %v638 = vld [vmem:[#allocation5 + $0x5fc] sm:$0xf]
    %v639 = vld [vmem:[#allocation5 + $0x600] sm:$0xf]
    %v640 = vld [vmem:[#allocation5 + $0x604] sm:$0xf]
    %v641 = vld [vmem:[#allocation5 + $0x608] sm:$0xf]
    %v642 = vld [vmem:[#allocation5 + $0x60c] sm:$0xf]
    %v643 = vld [vmem:[#allocation5 + $0x610] sm:$0xf]
    %v644 = vld [vmem:[#allocation5 + $0x614] sm:$0xf]
    %v645 = vld [vmem:[#allocation5 + $0x618] sm:$0xf]
    %v646 = vld [vmem:[#allocation5 + $0x61c] sm:$0xf]
    %v647 = vld [vmem:[#allocation5 + $0x620] sm:$0xf]
    %v648 = vld [vmem:[#allocation5 + $0x624] sm:$0xf]
    %v649 = vld [vmem:[#allocation5 + $0x628] sm:$0xf]
    %v650 = vld [vmem:[#allocation5 + $0x62c] sm:$0xf]
    %v651 = vld [vmem:[#allocation5 + $0x630] sm:$0xf]
    %v652 = vld [vmem:[#allocation5 + $0x634] sm:$0xf]
    %v653 = vld [vmem:[#allocation5 + $0x638] sm:$0xf]
    %v654 = vld [vmem:[#allocation5 + $0x63c] sm:$0xf]
    %v655 = vld [vmem:[#allocation5 + $0x640] sm:$0xf]
    %v656 = vld [vmem:[#allocation5 + $0x644] sm:$0xf]
    %v657 = vld [vmem:[#allocation5 + $0x648] sm:$0xf]
    %v658 = vld [vmem:[#allocation5 + $0x64c] sm:$0xf]
    %v659 = vld [vmem:[#allocation5 + $0x650] sm:$0xf]
    %v660 = vld [vmem:[#allocation5 + $0x654] sm:$0xf]
    %v661 = vld [vmem:[#allocation5 + $0x658] sm:$0xf]
    %v662 = vld [vmem:[#allocation5 + $0x65c] sm:$0xf]
    %v663 = vld [vmem:[#allocation5 + $0x660] sm:$0xf]
    %v664 = vld [vmem:[#allocation5 + $0x664] sm:$0xf]
    %v665 = vld [vmem:[#allocation5 + $0x668] sm:$0xf]
    %v666 = vld [vmem:[#allocation5 + $0x66c] sm:$0xf]
    %v667 = vld [vmem:[#allocation5 + $0x670] sm:$0xf]
    %v668 = vld [vmem:[#allocation5 + $0x674] sm:$0xf]
    %v669 = vld [vmem:[#allocation5 + $0x678] sm:$0xf]
    %v670 = vld [vmem:[#allocation5 + $0x67c] sm:$0xf]
    %v671 = vld [vmem:[#allocation5 + $0x680] sm:$0xf]
    %v672 = vld [vmem:[#allocation5 + $0x684] sm:$0xf]
    %v673 = vld [vmem:[#allocation5 + $0x688] sm:$0xf]
    %v674 = vld [vmem:[#allocation5 + $0x68c] sm:$0xf]
    %v675 = vld [vmem:[#allocation5 + $0x690] sm:$0xf]
    %v676 = vld [vmem:[#allocation5 + $0x694] sm:$0xf]
    %v677 = vld [vmem:[#allocation5 + $0x698] sm:$0xf]
    %v678 = vld [vmem:[#allocation5 + $0x69c] sm:$0xf]
    %v679 = vld [vmem:[#allocation5 + $0x6a0] sm:$0xf]
    %v680 = vld [vmem:[#allocation5 + $0x6a4] sm:$0xf]
    %v681 = vld [vmem:[#allocation5 + $0x6a8] sm:$0xf]
    %v682 = vld [vmem:[#allocation5 + $0x6ac] sm:$0xf]
    %v683 = vld [vmem:[#allocation5 + $0x6b0] sm:$0xf]
    %v684 = vld [vmem:[#allocation5 + $0x6b4] sm:$0xf]
    %v685 = vld [vmem:[#allocation5 + $0x6b8] sm:$0xf]
    %v686 = vld [vmem:[#allocation5 + $0x6bc] sm:$0xf]
    %v687 = vld [vmem:[#allocation5 + $0x6c0] sm:$0xf]
    %v688 = vld [vmem:[#allocation5 + $0x6c4] sm:$0xf]
    %v689 = vld [vmem:[#allocation5 + $0x6c8] sm:$0xf]
    %v690 = vld [vmem:[#allocation5 + $0x6cc] sm:$0xf]
    %v691 = vld [vmem:[#allocation5 + $0x6d0] sm:$0xf]
    %v692 = vld [vmem:[#allocation5 + $0x6d4] sm:$0xf]
    %v693 = vld [vmem:[#allocation5 + $0x6d8] sm:$0xf]
    %v694 = vld [vmem:[#allocation5 + $0x6dc] sm:$0xf]
    %v695 = vld [vmem:[#allocation5 + $0x6e0] sm:$0xf]
    %v696 = vld [vmem:[#allocation5 + $0x6e4] sm:$0xf]
    %v697 = vld [vmem:[#allocation5 + $0x6e8] sm:$0xf]
    %v698 = vld [vmem:[#allocation5 + $0x6ec] sm:$0xf]
    %v699 = vld [vmem:[#allocation5 + $0x6f0] sm:$0xf]
    %v700 = vld [vmem:[#allocation5 + $0x6f4] sm:$0xf]
    %v701 = vld [vmem:[#allocation5 + $0x6f8] sm:$0xf]
    %v702 = vld [vmem:[#allocation5 + $0x6fc] sm:$0xf]
    %v703 = vld [vmem:[#allocation5 + $0x700] sm:$0xf]
    %v704 = vld [vmem:[#allocation5 + $0x704] sm:$0xf]
    %v705 = vld [vmem:[#allocation5 + $0x708] sm:$0xf]
    %v706 = vld [vmem:[#allocation5 + $0x70c] sm:$0xf]
    %v707 = vld [vmem:[#allocation5 + $0x710] sm:$0xf]
    %v708 = vld [vmem:[#allocation5 + $0x714] sm:$0xf]
    %v709 = vld [vmem:[#allocation5 + $0x718] sm:$0xf]
    %v710 = vld [vmem:[#allocation5 + $0x71c] sm:$0xf]
    %v711 = vld [vmem:[#allocation5 + $0x720] sm:$0xf]
    %v712 = vld [vmem:[#allocation5 + $0x724] sm:$0xf]
    %v713 = vld [vmem:[#allocation5 + $0x728] sm:$0xf]
    %v714 = vld [vmem:[#allocation5 + $0x72c] sm:$0xf]
    %v715 = vld [vmem:[#allocation5 + $0x730] sm:$0xf]
    %v716 = vld [vmem:[#allocation5 + $0x734] sm:$0xf]
    %v717 = vld [vmem:[#allocation5 + $0x738] sm:$0xf]
    %v718 = vld [vmem:[#allocation5 + $0x73c] sm:$0xf]
    %v719 = vld [vmem:[#allocation5 + $0x740] sm:$0xf]
    %v720 = vld [vmem:[#allocation5 + $0x744] sm:$0xf]
    %v721 = vld [vmem:[#allocation5 + $0x748] sm:$0xf]
    %v722 = vld [vmem:[#allocation5 + $0x74c] sm:$0xf]
    %v723 = vld [vmem:[#allocation5 + $0x750] sm:$0xf]
    %v724 = vld [vmem:[#allocation5 + $0x754] sm:$0xf]
    %v725 = vld [vmem:[#allocation5 + $0x758] sm:$0xf]
    %v726 = vld [vmem:[#allocation5 + $0x75c] sm:$0xf]
    %v727 = vld [vmem:[#allocation5 + $0x760] sm:$0xf]
    %v728 = vld [vmem:[#allocation5 + $0x764] sm:$0xf]
    %v729 = vld [vmem:[#allocation5 + $0x768] sm:$0xf]
    %v730 = vld [vmem:[#allocation5 + $0x76c] sm:$0xf]
    %v731 = vld [vmem:[#allocation5 + $0x770] sm:$0xf]
    %v732 = vld [vmem:[#allocation5 + $0x774] sm:$0xf]
    %v733 = vld [vmem:[#allocation5 + $0x778] sm:$0xf]
    %v734 = vld [vmem:[#allocation5 + $0x77c] sm:$0xf]
    %v735 = vld [vmem:[#allocation5 + $0x780] sm:$0xf]
    %v736 = vld [vmem:[#allocation5 + $0x784] sm:$0xf]
    %v737 = vld [vmem:[#allocation5 + $0x788] sm:$0xf]
    %v738 = vld [vmem:[#allocation5 + $0x78c] sm:$0xf]
    %v739 = vld [vmem:[#allocation5 + $0x790] sm:$0xf]
    %v740 = vld [vmem:[#allocation5 + $0x794] sm:$0xf]
    %v741 = vld [vmem:[#allocation5 + $0x798] sm:$0xf]
    %v742 = vld [vmem:[#allocation5 + $0x79c] sm:$0xf]
    %v743 = vld [vmem:[#allocation5 + $0x7a0] sm:$0xf]
    %v744 = vld [vmem:[#allocation5 + $0x7a4] sm:$0xf]
    %v745 = vld [vmem:[#allocation5 + $0x7a8] sm:$0xf]
    %v746 = vld [vmem:[#allocation5 + $0x7ac] sm:$0xf]
    %v747 = vld [vmem:[#allocation5 + $0x7b0] sm:$0xf]
    %v748 = vld [vmem:[#allocation5 + $0x7b4] sm:$0xf]
    %v749 = vld [vmem:[#allocation5 + $0x7b8] sm:$0xf]
    %v750 = vld [vmem:[#allocation5 + $0x7bc] sm:$0xf]
    %v751 = vld [vmem:[#allocation5 + $0x7c0] sm:$0xf]
    %v752 = vld [vmem:[#allocation5 + $0x7c4] sm:$0xf]
    %v753 = vld [vmem:[#allocation5 + $0x7c8] sm:$0xf]
    %v754 = vld [vmem:[#allocation5 + $0x7cc] sm:$0xf]
    %v755 = vld [vmem:[#allocation5 + $0x7d0] sm:$0xf]
    %v756 = vld [vmem:[#allocation5 + $0x7d4] sm:$0xf]
    %v757 = vld [vmem:[#allocation5 + $0x7d8] sm:$0xf]
    %v758 = vld [vmem:[#allocation5 + $0x7dc] sm:$0xf]
    %v759 = vld [vmem:[#allocation5 + $0x7e0] sm:$0xf]
    %v760 = vld [vmem:[#allocation5 + $0x7e4] sm:$0xf]
    %v761 = vld [vmem:[#allocation5 + $0x7e8] sm:$0xf]
    %v762 = vld [vmem:[#allocation5 + $0x7ec] sm:$0xf]
    %v763 = vld [vmem:[#allocation5 + $0x7f0] sm:$0xf]
    %v764 = vld [vmem:[#allocation5 + $0x7f4] sm:$0xf]
    %v765 = vld [vmem:[#allocation5 + $0x7f8] sm:$0xf]
    %v766 = vld [vmem:[#allocation5 + $0x7fc] sm:$0xf]
    %v1279 = vunpack.c.l.b16 %v255
    %v1280 = vunpack.c.l.b16 %v256
    %v1281 = vunpack.c.l.b16 %v257
    %v1282 = vunpack.c.l.b16 %v258
    %v1283 = vunpack.c.l.b16 %v259
    %v1284 = vunpack.c.l.b16 %v260
    %v1285 = vunpack.c.l.b16 %v261
    %v1286 = vunpack.c.l.b16 %v262
    %v1287 = vunpack.c.l.b16 %v263
    %v1288 = vunpack.c.l.b16 %v264
    %v1289 = vunpack.c.l.b16 %v265
    %v1290 = vunpack.c.l.b16 %v266
    %v1291 = vunpack.c.l.b16 %v267
    %v1292 = vunpack.c.l.b16 %v268
    %v1293 = vunpack.c.l.b16 %v269
    %v1294 = vunpack.c.l.b16 %v270
    %v1295 = vunpack.c.l.b16 %v271
    %v1296 = vunpack.c.l.b16 %v272
    %v1297 = vunpack.c.l.b16 %v273
    %v1298 = vunpack.c.l.b16 %v274
    %v1299 = vunpack.c.l.b16 %v275
    %v1300 = vunpack.c.l.b16 %v276
    %v1301 = vunpack.c.l.b16 %v277
    %v1302 = vunpack.c.l.b16 %v278
    %v1303 = vunpack.c.l.b16 %v279
    %v1304 = vunpack.c.l.b16 %v280
    %v1305 = vunpack.c.l.b16 %v281
    %v1306 = vunpack.c.l.b16 %v282
    %v1307 = vunpack.c.l.b16 %v283
    %v1308 = vunpack.c.l.b16 %v284
    %v1309 = vunpack.c.l.b16 %v285
    %v1310 = vunpack.c.l.b16 %v286
    %v1311 = vunpack.c.l.b16 %v287
    %v1312 = vunpack.c.l.b16 %v288
    %v1313 = vunpack.c.l.b16 %v289
    %v1314 = vunpack.c.l.b16 %v290
    %v1315 = vunpack.c.l.b16 %v291
    %v1316 = vunpack.c.l.b16 %v292
    %v1317 = vunpack.c.l.b16 %v293
    %v1318 = vunpack.c.l.b16 %v294
    %v1319 = vunpack.c.l.b16 %v295
    %v1320 = vunpack.c.l.b16 %v296
    %v1321 = vunpack.c.l.b16 %v297
    %v1322 = vunpack.c.l.b16 %v298
    %v1323 = vunpack.c.l.b16 %v299
    %v1324 = vunpack.c.l.b16 %v300
    %v1325 = vunpack.c.l.b16 %v301
    %v1326 = vunpack.c.l.b16 %v302
    %v1327 = vunpack.c.l.b16 %v303
    %v1328 = vunpack.c.l.b16 %v304
    %v1329 = vunpack.c.l.b16 %v305
    %v1330 = vunpack.c.l.b16 %v306
    %v1331 = vunpack.c.l.b16 %v307
    %v1332 = vunpack.c.l.b16 %v308
    %v1333 = vunpack.c.l.b16 %v309
    %v1334 = vunpack.c.l.b16 %v310
    %v1335 = vunpack.c.l.b16 %v311
    %v1336 = vunpack.c.l.b16 %v312
    %v1337 = vunpack.c.l.b16 %v313
    %v1338 = vunpack.c.l.b16 %v314
    %v1339 = vunpack.c.l.b16 %v315
    %v1340 = vunpack.c.l.b16 %v316
    %v1341 = vunpack.c.l.b16 %v317
    %v1342 = vunpack.c.l.b16 %v318
    %v1343 = vunpack.c.l.b16 %v319
    %v1344 = vunpack.c.l.b16 %v320
    %v1345 = vunpack.c.l.b16 %v321
    %v1346 = vunpack.c.l.b16 %v322
    %v1347 = vunpack.c.l.b16 %v323
    %v1348 = vunpack.c.l.b16 %v324
    %v1349 = vunpack.c.l.b16 %v325
    %v1350 = vunpack.c.l.b16 %v326
    %v1351 = vunpack.c.l.b16 %v327
    %v1352 = vunpack.c.l.b16 %v328
    %v1353 = vunpack.c.l.b16 %v329
    %v1354 = vunpack.c.l.b16 %v330
    %v1355 = vunpack.c.l.b16 %v331
    %v1356 = vunpack.c.l.b16 %v332
    %v1357 = vunpack.c.l.b16 %v333
    %v1358 = vunpack.c.l.b16 %v334
    %v1359 = vunpack.c.l.b16 %v335
    %v1360 = vunpack.c.l.b16 %v336
    %v1361 = vunpack.c.l.b16 %v337
    %v1362 = vunpack.c.l.b16 %v338
    %v1363 = vunpack.c.l.b16 %v339
    %v1364 = vunpack.c.l.b16 %v340
    %v1365 = vunpack.c.l.b16 %v341
    %v1366 = vunpack.c.l.b16 %v342
    %v1367 = vunpack.c.l.b16 %v343
    %v1368 = vunpack.c.l.b16 %v344
    %v1369 = vunpack.c.l.b16 %v345
    %v1370 = vunpack.c.l.b16 %v346
    %v1371 = vunpack.c.l.b16 %v347
    %v1372 = vunpack.c.l.b16 %v348
    %v1373 = vunpack.c.l.b16 %v349
    %v1374 = vunpack.c.l.b16 %v350
    %v1375 = vunpack.c.l.b16 %v351
    %v1376 = vunpack.c.l.b16 %v352
    %v1377 = vunpack.c.l.b16 %v353
    %v1378 = vunpack.c.l.b16 %v354
    %v1379 = vunpack.c.l.b16 %v355
    %v1380 = vunpack.c.l.b16 %v356
    %v1381 = vunpack.c.l.b16 %v357
    %v1382 = vunpack.c.l.b16 %v358
    %v1383 = vunpack.c.l.b16 %v359
    %v1384 = vunpack.c.l.b16 %v360
    %v1385 = vunpack.c.l.b16 %v361
    %v1386 = vunpack.c.l.b16 %v362
    %v1387 = vunpack.c.l.b16 %v363
    %v1388 = vunpack.c.l.b16 %v364
    %v1389 = vunpack.c.l.b16 %v365
    %v1390 = vunpack.c.l.b16 %v366
    %v1391 = vunpack.c.l.b16 %v367
    %v1392 = vunpack.c.l.b16 %v368
    %v1393 = vunpack.c.l.b16 %v369
    %v1394 = vunpack.c.l.b16 %v370
    %v1395 = vunpack.c.l.b16 %v371
    %v1396 = vunpack.c.l.b16 %v372
    %v1397 = vunpack.c.l.b16 %v373
    %v1398 = vunpack.c.l.b16 %v374
    %v1399 = vunpack.c.l.b16 %v375
    %v1400 = vunpack.c.l.b16 %v376
    %v1401 = vunpack.c.l.b16 %v377
    %v1402 = vunpack.c.l.b16 %v378
    %v1403 = vunpack.c.l.b16 %v379
    %v1404 = vunpack.c.l.b16 %v380
    %v1405 = vunpack.c.l.b16 %v381
    %v1406 = vunpack.c.l.b16 %v382
    %v1407 = vunpack.c.l.b16 %v383
    %v1408 = vunpack.c.l.b16 %v384
    %v1409 = vunpack.c.l.b16 %v385
    %v1410 = vunpack.c.l.b16 %v386
    %v1411 = vunpack.c.l.b16 %v387
    %v1412 = vunpack.c.l.b16 %v388
    %v1413 = vunpack.c.l.b16 %v389
    %v1414 = vunpack.c.l.b16 %v390
    %v1415 = vunpack.c.l.b16 %v391
    %v1416 = vunpack.c.l.b16 %v392
    %v1417 = vunpack.c.l.b16 %v393
    %v1418 = vunpack.c.l.b16 %v394
    %v1419 = vunpack.c.l.b16 %v395
    %v1420 = vunpack.c.l.b16 %v396
    %v1421 = vunpack.c.l.b16 %v397
    %v1422 = vunpack.c.l.b16 %v398
    %v1423 = vunpack.c.l.b16 %v399
    %v1424 = vunpack.c.l.b16 %v400
    %v1425 = vunpack.c.l.b16 %v401
    %v1426 = vunpack.c.l.b16 %v402
    %v1427 = vunpack.c.l.b16 %v403
    %v1428 = vunpack.c.l.b16 %v404
    %v1429 = vunpack.c.l.b16 %v405
    %v1430 = vunpack.c.l.b16 %v406
    %v1431 = vunpack.c.l.b16 %v407
    %v1432 = vunpack.c.l.b16 %v408
    %v1433 = vunpack.c.l.b16 %v409
    %v1434 = vunpack.c.l.b16 %v410
    %v1435 = vunpack.c.l.b16 %v411
    %v1436 = vunpack.c.l.b16 %v412
    %v1437 = vunpack.c.l.b16 %v413
    %v1438 = vunpack.c.l.b16 %v414
    %v1439 = vunpack.c.l.b16 %v415
    %v1440 = vunpack.c.l.b16 %v416
    %v1441 = vunpack.c.l.b16 %v417
    %v1442 = vunpack.c.l.b16 %v418
    %v1443 = vunpack.c.l.b16 %v419
    %v1444 = vunpack.c.l.b16 %v420
    %v1445 = vunpack.c.l.b16 %v421
    %v1446 = vunpack.c.l.b16 %v422
    %v1447 = vunpack.c.l.b16 %v423
    %v1448 = vunpack.c.l.b16 %v424
    %v1449 = vunpack.c.l.b16 %v425
    %v1450 = vunpack.c.l.b16 %v426
    %v1451 = vunpack.c.l.b16 %v427
    %v1452 = vunpack.c.l.b16 %v428
    %v1453 = vunpack.c.l.b16 %v429
    %v1454 = vunpack.c.l.b16 %v430
    %v1455 = vunpack.c.l.b16 %v431
    %v1456 = vunpack.c.l.b16 %v432
    %v1457 = vunpack.c.l.b16 %v433
    %v1458 = vunpack.c.l.b16 %v434
    %v1459 = vunpack.c.l.b16 %v435
    %v1460 = vunpack.c.l.b16 %v436
    %v1461 = vunpack.c.l.b16 %v437
    %v1462 = vunpack.c.l.b16 %v438
    %v1463 = vunpack.c.l.b16 %v439
    %v1464 = vunpack.c.l.b16 %v440
    %v1465 = vunpack.c.l.b16 %v441
    %v1466 = vunpack.c.l.b16 %v442
    %v1467 = vunpack.c.l.b16 %v443
    %v1468 = vunpack.c.l.b16 %v444
    %v1469 = vunpack.c.l.b16 %v445
    %v1470 = vunpack.c.l.b16 %v446
    %v1471 = vunpack.c.l.b16 %v447
    %v1472 = vunpack.c.l.b16 %v448
    %v1473 = vunpack.c.l.b16 %v449
    %v1474 = vunpack.c.l.b16 %v450
    %v1475 = vunpack.c.l.b16 %v451
    %v1476 = vunpack.c.l.b16 %v452
    %v1477 = vunpack.c.l.b16 %v453
    %v1478 = vunpack.c.l.b16 %v454
    %v1479 = vunpack.c.l.b16 %v455
    %v1480 = vunpack.c.l.b16 %v456
    %v1481 = vunpack.c.l.b16 %v457
    %v1482 = vunpack.c.l.b16 %v458
    %v1483 = vunpack.c.l.b16 %v459
    %v1484 = vunpack.c.l.b16 %v460
    %v1485 = vunpack.c.l.b16 %v461
    %v1486 = vunpack.c.l.b16 %v462
    %v1487 = vunpack.c.l.b16 %v463
    %v1488 = vunpack.c.l.b16 %v464
    %v1489 = vunpack.c.l.b16 %v465
    %v1490 = vunpack.c.l.b16 %v466
    %v1491 = vunpack.c.l.b16 %v467
    %v1492 = vunpack.c.l.b16 %v468
    %v1493 = vunpack.c.l.b16 %v469
    %v1494 = vunpack.c.l.b16 %v470
    %v1495 = vunpack.c.l.b16 %v471
    %v1496 = vunpack.c.l.b16 %v472
    %v1497 = vunpack.c.l.b16 %v473
    %v1498 = vunpack.c.l.b16 %v474
    %v1499 = vunpack.c.l.b16 %v475
    %v1500 = vunpack.c.l.b16 %v476
    %v1501 = vunpack.c.l.b16 %v477
    %v1502 = vunpack.c.l.b16 %v478
    %v1503 = vunpack.c.l.b16 %v479
    %v1504 = vunpack.c.l.b16 %v480
    %v1505 = vunpack.c.l.b16 %v481
    %v1506 = vunpack.c.l.b16 %v482
    %v1507 = vunpack.c.l.b16 %v483
    %v1508 = vunpack.c.l.b16 %v484
    %v1509 = vunpack.c.l.b16 %v485
    %v1510 = vunpack.c.l.b16 %v486
    %v1511 = vunpack.c.l.b16 %v487
    %v1512 = vunpack.c.l.b16 %v488
    %v1513 = vunpack.c.l.b16 %v489
    %v1514 = vunpack.c.l.b16 %v490
    %v1515 = vunpack.c.l.b16 %v491
    %v1516 = vunpack.c.l.b16 %v492
    %v1517 = vunpack.c.l.b16 %v493
    %v1518 = vunpack.c.l.b16 %v494
    %v1519 = vunpack.c.l.b16 %v495
    %v1520 = vunpack.c.l.b16 %v496
    %v1521 = vunpack.c.l.b16 %v497
    %v1522 = vunpack.c.l.b16 %v498
    %v1523 = vunpack.c.l.b16 %v499
    %v1524 = vunpack.c.l.b16 %v500
    %v1525 = vunpack.c.l.b16 %v501
    %v1526 = vunpack.c.l.b16 %v502
    %v1527 = vunpack.c.l.b16 %v503
    %v1528 = vunpack.c.l.b16 %v504
    %v1529 = vunpack.c.l.b16 %v505
    %v1530 = vunpack.c.l.b16 %v506
    %v1531 = vunpack.c.l.b16 %v507
    %v1532 = vunpack.c.l.b16 %v508
    %v1533 = vunpack.c.l.b16 %v509
    %v1534 = vunpack.c.l.b16 %v510
    %v1535 = vunpack.c.l.b16 %v511
    %v1536 = vunpack.c.l.b16 %v512
    %v1537 = vunpack.c.l.b16 %v513
    %v1538 = vunpack.c.l.b16 %v514
    %v1539 = vunpack.c.l.b16 %v515
    %v1540 = vunpack.c.l.b16 %v516
    %v1541 = vunpack.c.l.b16 %v517
    %v1542 = vunpack.c.l.b16 %v518
    %v1543 = vunpack.c.l.b16 %v519
    %v1544 = vunpack.c.l.b16 %v520
    %v1545 = vunpack.c.l.b16 %v521
    %v1546 = vunpack.c.l.b16 %v522
    %v1547 = vunpack.c.l.b16 %v523
    %v1548 = vunpack.c.l.b16 %v524
    %v1549 = vunpack.c.l.b16 %v525
    %v1550 = vunpack.c.l.b16 %v526
    %v1551 = vunpack.c.l.b16 %v527
    %v1552 = vunpack.c.l.b16 %v528
    %v1553 = vunpack.c.l.b16 %v529
    %v1554 = vunpack.c.l.b16 %v530
    %v1555 = vunpack.c.l.b16 %v531
    %v1556 = vunpack.c.l.b16 %v532
    %v1557 = vunpack.c.l.b16 %v533
    %v1558 = vunpack.c.l.b16 %v534
    %v1559 = vunpack.c.l.b16 %v535
    %v1560 = vunpack.c.l.b16 %v536
    %v1561 = vunpack.c.l.b16 %v537
    %v1562 = vunpack.c.l.b16 %v538
    %v1563 = vunpack.c.l.b16 %v539
    %v1564 = vunpack.c.l.b16 %v540
    %v1565 = vunpack.c.l.b16 %v541
    %v1566 = vunpack.c.l.b16 %v542
    %v1567 = vunpack.c.l.b16 %v543
    %v1568 = vunpack.c.l.b16 %v544
    %v1569 = vunpack.c.l.b16 %v545
    %v1570 = vunpack.c.l.b16 %v546
    %v1571 = vunpack.c.l.b16 %v547
    %v1572 = vunpack.c.l.b16 %v548
    %v1573 = vunpack.c.l.b16 %v549
    %v1574 = vunpack.c.l.b16 %v550
    %v1575 = vunpack.c.l.b16 %v551
    %v1576 = vunpack.c.l.b16 %v552
    %v1577 = vunpack.c.l.b16 %v553
    %v1578 = vunpack.c.l.b16 %v554
    %v1579 = vunpack.c.l.b16 %v555
    %v1580 = vunpack.c.l.b16 %v556
    %v1581 = vunpack.c.l.b16 %v557
    %v1582 = vunpack.c.l.b16 %v558
    %v1583 = vunpack.c.l.b16 %v559
    %v1584 = vunpack.c.l.b16 %v560
    %v1585 = vunpack.c.l.b16 %v561
    %v1586 = vunpack.c.l.b16 %v562
    %v1587 = vunpack.c.l.b16 %v563
    %v1588 = vunpack.c.l.b16 %v564
    %v1589 = vunpack.c.l.b16 %v565
    %v1590 = vunpack.c.l.b16 %v566
    %v1591 = vunpack.c.l.b16 %v567
    %v1592 = vunpack.c.l.b16 %v568
    %v1593 = vunpack.c.l.b16 %v569
    %v1594 = vunpack.c.l.b16 %v570
    %v1595 = vunpack.c.l.b16 %v571
    %v1596 = vunpack.c.l.b16 %v572
    %v1597 = vunpack.c.l.b16 %v573
    %v1598 = vunpack.c.l.b16 %v574
    %v1599 = vunpack.c.l.b16 %v575
    %v1600 = vunpack.c.l.b16 %v576
    %v1601 = vunpack.c.l.b16 %v577
    %v1602 = vunpack.c.l.b16 %v578
    %v1603 = vunpack.c.l.b16 %v579
    %v1604 = vunpack.c.l.b16 %v580
    %v1605 = vunpack.c.l.b16 %v581
    %v1606 = vunpack.c.l.b16 %v582
    %v1607 = vunpack.c.l.b16 %v583
    %v1608 = vunpack.c.l.b16 %v584
    %v1609 = vunpack.c.l.b16 %v585
    %v1610 = vunpack.c.l.b16 %v586
    %v1611 = vunpack.c.l.b16 %v587
    %v1612 = vunpack.c.l.b16 %v588
    %v1613 = vunpack.c.l.b16 %v589
    %v1614 = vunpack.c.l.b16 %v590
    %v1615 = vunpack.c.l.b16 %v591
    %v1616 = vunpack.c.l.b16 %v592
    %v1617 = vunpack.c.l.b16 %v593
    %v1618 = vunpack.c.l.b16 %v594
    %v1619 = vunpack.c.l.b16 %v595
    %v1620 = vunpack.c.l.b16 %v596
    %v1621 = vunpack.c.l.b16 %v597
    %v1622 = vunpack.c.l.b16 %v598
    %v1623 = vunpack.c.l.b16 %v599
    %v1624 = vunpack.c.l.b16 %v600
    %v1625 = vunpack.c.l.b16 %v601
    %v1626 = vunpack.c.l.b16 %v602
    %v1627 = vunpack.c.l.b16 %v603
    %v1628 = vunpack.c.l.b16 %v604
    %v1629 = vunpack.c.l.b16 %v605
    %v1630 = vunpack.c.l.b16 %v606
    %v1631 = vunpack.c.l.b16 %v607
    %v1632 = vunpack.c.l.b16 %v608
    %v1633 = vunpack.c.l.b16 %v609
    %v1634 = vunpack.c.l.b16 %v610
    %v1635 = vunpack.c.l.b16 %v611
    %v1636 = vunpack.c.l.b16 %v612
    %v1637 = vunpack.c.l.b16 %v613
    %v1638 = vunpack.c.l.b16 %v614
    %v1639 = vunpack.c.l.b16 %v615
    %v1640 = vunpack.c.l.b16 %v616
    %v1641 = vunpack.c.l.b16 %v617
    %v1642 = vunpack.c.l.b16 %v618
    %v1643 = vunpack.c.l.b16 %v619
    %v1644 = vunpack.c.l.b16 %v620
    %v1645 = vunpack.c.l.b16 %v621
    %v1646 = vunpack.c.l.b16 %v622
    %v1647 = vunpack.c.l.b16 %v623
    %v1648 = vunpack.c.l.b16 %v624
    %v1649 = vunpack.c.l.b16 %v625
    %v1650 = vunpack.c.l.b16 %v626
    %v1651 = vunpack.c.l.b16 %v627
    %v1652 = vunpack.c.l.b16 %v628
    %v1653 = vunpack.c.l.b16 %v629
    %v1654 = vunpack.c.l.b16 %v630
    %v1655 = vunpack.c.l.b16 %v631
    %v1656 = vunpack.c.l.b16 %v632
    %v1657 = vunpack.c.l.b16 %v633
    %v1658 = vunpack.c.l.b16 %v634
    %v1659 = vunpack.c.l.b16 %v635
    %v1660 = vunpack.c.l.b16 %v636
    %v1661 = vunpack.c.l.b16 %v637
    %v1662 = vunpack.c.l.b16 %v638
    %v1663 = vunpack.c.l.b16 %v639
    %v1664 = vunpack.c.l.b16 %v640
    %v1665 = vunpack.c.l.b16 %v641
    %v1666 = vunpack.c.l.b16 %v642
    %v1667 = vunpack.c.l.b16 %v643
    %v1668 = vunpack.c.l.b16 %v644
    %v1669 = vunpack.c.l.b16 %v645
    %v1670 = vunpack.c.l.b16 %v646
    %v1671 = vunpack.c.l.b16 %v647
    %v1672 = vunpack.c.l.b16 %v648
    %v1673 = vunpack.c.l.b16 %v649
    %v1674 = vunpack.c.l.b16 %v650
    %v1675 = vunpack.c.l.b16 %v651
    %v1676 = vunpack.c.l.b16 %v652
    %v1677 = vunpack.c.l.b16 %v653
    %v1678 = vunpack.c.l.b16 %v654
    %v1679 = vunpack.c.l.b16 %v655
    %v1680 = vunpack.c.l.b16 %v656
    %v1681 = vunpack.c.l.b16 %v657
    %v1682 = vunpack.c.l.b16 %v658
    %v1683 = vunpack.c.l.b16 %v659
    %v1684 = vunpack.c.l.b16 %v660
    %v1685 = vunpack.c.l.b16 %v661
    %v1686 = vunpack.c.l.b16 %v662
    %v1687 = vunpack.c.l.b16 %v663
    %v1688 = vunpack.c.l.b16 %v664
    %v1689 = vunpack.c.l.b16 %v665
    %v1690 = vunpack.c.l.b16 %v666
    %v1691 = vunpack.c.l.b16 %v667
    %v1692 = vunpack.c.l.b16 %v668
    %v1693 = vunpack.c.l.b16 %v669
    %v1694 = vunpack.c.l.b16 %v670
    %v1695 = vunpack.c.l.b16 %v671
    %v1696 = vunpack.c.l.b16 %v672
    %v1697 = vunpack.c.l.b16 %v673
    %v1698 = vunpack.c.l.b16 %v674
    %v1699 = vunpack.c.l.b16 %v675
    %v1700 = vunpack.c.l.b16 %v676
    %v1701 = vunpack.c.l.b16 %v677
    %v1702 = vunpack.c.l.b16 %v678
    %v1703 = vunpack.c.l.b16 %v679
    %v1704 = vunpack.c.l.b16 %v680
    %v1705 = vunpack.c.l.b16 %v681
    %v1706 = vunpack.c.l.b16 %v682
    %v1707 = vunpack.c.l.b16 %v683
    %v1708 = vunpack.c.l.b16 %v684
    %v1709 = vunpack.c.l.b16 %v685
    %v1710 = vunpack.c.l.b16 %v686
    %v1711 = vunpack.c.l.b16 %v687
    %v1712 = vunpack.c.l.b16 %v688
    %v1713 = vunpack.c.l.b16 %v689
    %v1714 = vunpack.c.l.b16 %v690
    %v1715 = vunpack.c.l.b16 %v691
    %v1716 = vunpack.c.l.b16 %v692
    %v1717 = vunpack.c.l.b16 %v693
    %v1718 = vunpack.c.l.b16 %v694
    %v1719 = vunpack.c.l.b16 %v695
    %v1720 = vunpack.c.l.b16 %v696
    %v1721 = vunpack.c.l.b16 %v697
    %v1722 = vunpack.c.l.b16 %v698
    %v1723 = vunpack.c.l.b16 %v699
    %v1724 = vunpack.c.l.b16 %v700
    %v1725 = vunpack.c.l.b16 %v701
    %v1726 = vunpack.c.l.b16 %v702
    %v1727 = vunpack.c.l.b16 %v703
    %v1728 = vunpack.c.l.b16 %v704
    %v1729 = vunpack.c.l.b16 %v705
    %v1730 = vunpack.c.l.b16 %v706
    %v1731 = vunpack.c.l.b16 %v707
    %v1732 = vunpack.c.l.b16 %v708
    %v1733 = vunpack.c.l.b16 %v709
    %v1734 = vunpack.c.l.b16 %v710
    %v1735 = vunpack.c.l.b16 %v711
    %v1736 = vunpack.c.l.b16 %v712
    %v1737 = vunpack.c.l.b16 %v713
    %v1738 = vunpack.c.l.b16 %v714
    %v1739 = vunpack.c.l.b16 %v715
    %v1740 = vunpack.c.l.b16 %v716
    %v1741 = vunpack.c.l.b16 %v717
    %v1742 = vunpack.c.l.b16 %v718
    %v1743 = vunpack.c.l.b16 %v719
    %v1744 = vunpack.c.l.b16 %v720
    %v1745 = vunpack.c.l.b16 %v721
    %v1746 = vunpack.c.l.b16 %v722
    %v1747 = vunpack.c.l.b16 %v723
    %v1748 = vunpack.c.l.b16 %v724
    %v1749 = vunpack.c.l.b16 %v725
    %v1750 = vunpack.c.l.b16 %v726
    %v1751 = vunpack.c.l.b16 %v727
    %v1752 = vunpack.c.l.b16 %v728
    %v1753 = vunpack.c.l.b16 %v729
    %v1754 = vunpack.c.l.b16 %v730
    %v1755 = vunpack.c.l.b16 %v731
    %v1756 = vunpack.c.l.b16 %v732
    %v1757 = vunpack.c.l.b16 %v733
    %v1758 = vunpack.c.l.b16 %v734
    %v1759 = vunpack.c.l.b16 %v735
    %v1760 = vunpack.c.l.b16 %v736
    %v1761 = vunpack.c.l.b16 %v737
    %v1762 = vunpack.c.l.b16 %v738
    %v1763 = vunpack.c.l.b16 %v739
    %v1764 = vunpack.c.l.b16 %v740
    %v1765 = vunpack.c.l.b16 %v741
    %v1766 = vunpack.c.l.b16 %v742
    %v1767 = vunpack.c.l.b16 %v743
    %v1768 = vunpack.c.l.b16 %v744
    %v1769 = vunpack.c.l.b16 %v745
    %v1770 = vunpack.c.l.b16 %v746
    %v1771 = vunpack.c.l.b16 %v747
    %v1772 = vunpack.c.l.b16 %v748
    %v1773 = vunpack.c.l.b16 %v749
    %v1774 = vunpack.c.l.b16 %v750
    %v1775 = vunpack.c.l.b16 %v751
    %v1776 = vunpack.c.l.b16 %v752
    %v1777 = vunpack.c.l.b16 %v753
    %v1778 = vunpack.c.l.b16 %v754
    %v1779 = vunpack.c.l.b16 %v755
    %v1780 = vunpack.c.l.b16 %v756
    %v1781 = vunpack.c.l.b16 %v757
    %v1782 = vunpack.c.l.b16 %v758
    %v1783 = vunpack.c.l.b16 %v759
    %v1784 = vunpack.c.l.b16 %v760
    %v1785 = vunpack.c.l.b16 %v761
    %v1786 = vunpack.c.l.b16 %v762
    %v1787 = vunpack.c.l.b16 %v763
    %v1788 = vunpack.c.l.b16 %v764
    %v1789 = vunpack.c.l.b16 %v765
    %v1790 = vunpack.c.l.b16 %v766
    %v1791 = vpack.c.b16 %v1280, %v1279
    %v1792 = vpack.c.b16 %v1282, %v1281
    %v1793 = vpack.c.b16 %v1284, %v1283
    %v1794 = vpack.c.b16 %v1286, %v1285
    %v1795 = vpack.c.b16 %v1288, %v1287
    %v1796 = vpack.c.b16 %v1290, %v1289
    %v1797 = vpack.c.b16 %v1292, %v1291
    %v1798 = vpack.c.b16 %v1294, %v1293
    %v1799 = vpack.c.b16 %v1296, %v1295
    %v1800 = vpack.c.b16 %v1298, %v1297
    %v1801 = vpack.c.b16 %v1300, %v1299
    %v1802 = vpack.c.b16 %v1302, %v1301
    %v1803 = vpack.c.b16 %v1304, %v1303
    %v1804 = vpack.c.b16 %v1306, %v1305
    %v1805 = vpack.c.b16 %v1308, %v1307
    %v1806 = vpack.c.b16 %v1310, %v1309
    %v1807 = vpack.c.b16 %v1312, %v1311
    %v1808 = vpack.c.b16 %v1314, %v1313
    %v1809 = vpack.c.b16 %v1316, %v1315
    %v1810 = vpack.c.b16 %v1318, %v1317
    %v1811 = vpack.c.b16 %v1320, %v1319
    %v1812 = vpack.c.b16 %v1322, %v1321
    %v1813 = vpack.c.b16 %v1324, %v1323
    %v1814 = vpack.c.b16 %v1326, %v1325
    %v1815 = vpack.c.b16 %v1328, %v1327
    %v1816 = vpack.c.b16 %v1330, %v1329
    %v1817 = vpack.c.b16 %v1332, %v1331
    %v1818 = vpack.c.b16 %v1334, %v1333
    %v1819 = vpack.c.b16 %v1336, %v1335
    %v1820 = vpack.c.b16 %v1338, %v1337
    %v1821 = vpack.c.b16 %v1340, %v1339
    %v1822 = vpack.c.b16 %v1342, %v1341
    %v1823 = vpack.c.b16 %v1344, %v1343
    %v1824 = vpack.c.b16 %v1346, %v1345
    %v1825 = vpack.c.b16 %v1348, %v1347
    %v1826 = vpack.c.b16 %v1350, %v1349
    %v1827 = vpack.c.b16 %v1352, %v1351
    %v1828 = vpack.c.b16 %v1354, %v1353
    %v1829 = vpack.c.b16 %v1356, %v1355
    %v1830 = vpack.c.b16 %v1358, %v1357
    %v1831 = vpack.c.b16 %v1360, %v1359
    %v1832 = vpack.c.b16 %v1362, %v1361
    %v1833 = vpack.c.b16 %v1364, %v1363
    %v1834 = vpack.c.b16 %v1366, %v1365
    %v1835 = vpack.c.b16 %v1368, %v1367
    %v1836 = vpack.c.b16 %v1370, %v1369
    %v1837 = vpack.c.b16 %v1372, %v1371
    %v1838 = vpack.c.b16 %v1374, %v1373
    %v1839 = vpack.c.b16 %v1376, %v1375
    %v1840 = vpack.c.b16 %v1378, %v1377
    %v1841 = vpack.c.b16 %v1380, %v1379
    %v1842 = vpack.c.b16 %v1382, %v1381
    %v1843 = vpack.c.b16 %v1384, %v1383
    %v1844 = vpack.c.b16 %v1386, %v1385
    %v1845 = vpack.c.b16 %v1388, %v1387
    %v1846 = vpack.c.b16 %v1390, %v1389
    %v1847 = vpack.c.b16 %v1392, %v1391
    %v1848 = vpack.c.b16 %v1394, %v1393
    %v1849 = vpack.c.b16 %v1396, %v1395
    %v1850 = vpack.c.b16 %v1398, %v1397
    %v1851 = vpack.c.b16 %v1400, %v1399
    %v1852 = vpack.c.b16 %v1402, %v1401
    %v1853 = vpack.c.b16 %v1404, %v1403
    %v1854 = vpack.c.b16 %v1406, %v1405
    %v1855 = vpack.c.b16 %v1408, %v1407
    %v1856 = vpack.c.b16 %v1410, %v1409
    %v1857 = vpack.c.b16 %v1412, %v1411
    %v1858 = vpack.c.b16 %v1414, %v1413
    %v1859 = vpack.c.b16 %v1416, %v1415
    %v1860 = vpack.c.b16 %v1418, %v1417
    %v1861 = vpack.c.b16 %v1420, %v1419
    %v1862 = vpack.c.b16 %v1422, %v1421
    %v1863 = vpack.c.b16 %v1424, %v1423
    %v1864 = vpack.c.b16 %v1426, %v1425
    %v1865 = vpack.c.b16 %v1428, %v1427
    %v1866 = vpack.c.b16 %v1430, %v1429
    %v1867 = vpack.c.b16 %v1432, %v1431
    %v1868 = vpack.c.b16 %v1434, %v1433
    %v1869 = vpack.c.b16 %v1436, %v1435
    %v1870 = vpack.c.b16 %v1438, %v1437
    %v1871 = vpack.c.b16 %v1440, %v1439
    %v1872 = vpack.c.b16 %v1442, %v1441
    %v1873 = vpack.c.b16 %v1444, %v1443
    %v1874 = vpack.c.b16 %v1446, %v1445
    %v1875 = vpack.c.b16 %v1448, %v1447
    %v1876 = vpack.c.b16 %v1450, %v1449
    %v1877 = vpack.c.b16 %v1452, %v1451
    %v1878 = vpack.c.b16 %v1454, %v1453
    %v1879 = vpack.c.b16 %v1456, %v1455
    %v1880 = vpack.c.b16 %v1458, %v1457
    %v1881 = vpack.c.b16 %v1460, %v1459
    %v1882 = vpack.c.b16 %v1462, %v1461
    %v1883 = vpack.c.b16 %v1464, %v1463
    %v1884 = vpack.c.b16 %v1466, %v1465
    %v1885 = vpack.c.b16 %v1468, %v1467
    %v1886 = vpack.c.b16 %v1470, %v1469
    %v1887 = vpack.c.b16 %v1472, %v1471
    %v1888 = vpack.c.b16 %v1474, %v1473
    %v1889 = vpack.c.b16 %v1476, %v1475
    %v1890 = vpack.c.b16 %v1478, %v1477
    %v1891 = vpack.c.b16 %v1480, %v1479
    %v1892 = vpack.c.b16 %v1482, %v1481
    %v1893 = vpack.c.b16 %v1484, %v1483
    %v1894 = vpack.c.b16 %v1486, %v1485
    %v1895 = vpack.c.b16 %v1488, %v1487
    %v1896 = vpack.c.b16 %v1490, %v1489
    %v1897 = vpack.c.b16 %v1492, %v1491
    %v1898 = vpack.c.b16 %v1494, %v1493
    %v1899 = vpack.c.b16 %v1496, %v1495
    %v1900 = vpack.c.b16 %v1498, %v1497
    %v1901 = vpack.c.b16 %v1500, %v1499
    %v1902 = vpack.c.b16 %v1502, %v1501
    %v1903 = vpack.c.b16 %v1504, %v1503
    %v1904 = vpack.c.b16 %v1506, %v1505
    %v1905 = vpack.c.b16 %v1508, %v1507
    %v1906 = vpack.c.b16 %v1510, %v1509
    %v1907 = vpack.c.b16 %v1512, %v1511
    %v1908 = vpack.c.b16 %v1514, %v1513
    %v1909 = vpack.c.b16 %v1516, %v1515
    %v1910 = vpack.c.b16 %v1518, %v1517
    %v1911 = vpack.c.b16 %v1520, %v1519
    %v1912 = vpack.c.b16 %v1522, %v1521
    %v1913 = vpack.c.b16 %v1524, %v1523
    %v1914 = vpack.c.b16 %v1526, %v1525
    %v1915 = vpack.c.b16 %v1528, %v1527
    %v1916 = vpack.c.b16 %v1530, %v1529
    %v1917 = vpack.c.b16 %v1532, %v1531
    %v1918 = vpack.c.b16 %v1534, %v1533
    %v1919 = vpack.c.b16 %v1536, %v1535
    %v1920 = vpack.c.b16 %v1538, %v1537
    %v1921 = vpack.c.b16 %v1540, %v1539
    %v1922 = vpack.c.b16 %v1542, %v1541
    %v1923 = vpack.c.b16 %v1544, %v1543
    %v1924 = vpack.c.b16 %v1546, %v1545
    %v1925 = vpack.c.b16 %v1548, %v1547
    %v1926 = vpack.c.b16 %v1550, %v1549
    %v1927 = vpack.c.b16 %v1552, %v1551
    %v1928 = vpack.c.b16 %v1554, %v1553
    %v1929 = vpack.c.b16 %v1556, %v1555
    %v1930 = vpack.c.b16 %v1558, %v1557
    %v1931 = vpack.c.b16 %v1560, %v1559
    %v1932 = vpack.c.b16 %v1562, %v1561
    %v1933 = vpack.c.b16 %v1564, %v1563
    %v1934 = vpack.c.b16 %v1566, %v1565
    %v1935 = vpack.c.b16 %v1568, %v1567
    %v1936 = vpack.c.b16 %v1570, %v1569
    %v1937 = vpack.c.b16 %v1572, %v1571
    %v1938 = vpack.c.b16 %v1574, %v1573
    %v1939 = vpack.c.b16 %v1576, %v1575
    %v1940 = vpack.c.b16 %v1578, %v1577
    %v1941 = vpack.c.b16 %v1580, %v1579
    %v1942 = vpack.c.b16 %v1582, %v1581
    %v1943 = vpack.c.b16 %v1584, %v1583
    %v1944 = vpack.c.b16 %v1586, %v1585
    %v1945 = vpack.c.b16 %v1588, %v1587
    %v1946 = vpack.c.b16 %v1590, %v1589
    %v1947 = vpack.c.b16 %v1592, %v1591
    %v1948 = vpack.c.b16 %v1594, %v1593
    %v1949 = vpack.c.b16 %v1596, %v1595
    %v1950 = vpack.c.b16 %v1598, %v1597
    %v1951 = vpack.c.b16 %v1600, %v1599
    %v1952 = vpack.c.b16 %v1602, %v1601
    %v1953 = vpack.c.b16 %v1604, %v1603
    %v1954 = vpack.c.b16 %v1606, %v1605
    %v1955 = vpack.c.b16 %v1608, %v1607
    %v1956 = vpack.c.b16 %v1610, %v1609
    %v1957 = vpack.c.b16 %v1612, %v1611
    %v1958 = vpack.c.b16 %v1614, %v1613
    %v1959 = vpack.c.b16 %v1616, %v1615
    %v1960 = vpack.c.b16 %v1618, %v1617
    %v1961 = vpack.c.b16 %v1620, %v1619
    %v1962 = vpack.c.b16 %v1622, %v1621
    %v1963 = vpack.c.b16 %v1624, %v1623
    %v1964 = vpack.c.b16 %v1626, %v1625
    %v1965 = vpack.c.b16 %v1628, %v1627
    %v1966 = vpack.c.b16 %v1630, %v1629
    %v1967 = vpack.c.b16 %v1632, %v1631
    %v1968 = vpack.c.b16 %v1634, %v1633
    %v1969 = vpack.c.b16 %v1636, %v1635
    %v1970 = vpack.c.b16 %v1638, %v1637
    %v1971 = vpack.c.b16 %v1640, %v1639
    %v1972 = vpack.c.b16 %v1642, %v1641
    %v1973 = vpack.c.b16 %v1644, %v1643
    %v1974 = vpack.c.b16 %v1646, %v1645
    %v1975 = vpack.c.b16 %v1648, %v1647
    %v1976 = vpack.c.b16 %v1650, %v1649
    %v1977 = vpack.c.b16 %v1652, %v1651
    %v1978 = vpack.c.b16 %v1654, %v1653
    %v1979 = vpack.c.b16 %v1656, %v1655
    %v1980 = vpack.c.b16 %v1658, %v1657
    %v1981 = vpack.c.b16 %v1660, %v1659
    %v1982 = vpack.c.b16 %v1662, %v1661
    %v1983 = vpack.c.b16 %v1664, %v1663
    %v1984 = vpack.c.b16 %v1666, %v1665
    %v1985 = vpack.c.b16 %v1668, %v1667
    %v1986 = vpack.c.b16 %v1670, %v1669
    %v1987 = vpack.c.b16 %v1672, %v1671
    %v1988 = vpack.c.b16 %v1674, %v1673
    %v1989 = vpack.c.b16 %v1676, %v1675
    %v1990 = vpack.c.b16 %v1678, %v1677
    %v1991 = vpack.c.b16 %v1680, %v1679
    %v1992 = vpack.c.b16 %v1682, %v1681
    %v1993 = vpack.c.b16 %v1684, %v1683
    %v1994 = vpack.c.b16 %v1686, %v1685
    %v1995 = vpack.c.b16 %v1688, %v1687
    %v1996 = vpack.c.b16 %v1690, %v1689
    %v1997 = vpack.c.b16 %v1692, %v1691
    %v1998 = vpack.c.b16 %v1694, %v1693
    %v1999 = vpack.c.b16 %v1696, %v1695
    %v2000 = vpack.c.b16 %v1698, %v1697
    %v2001 = vpack.c.b16 %v1700, %v1699
    %v2002 = vpack.c.b16 %v1702, %v1701
    %v2003 = vpack.c.b16 %v1704, %v1703
    %v2004 = vpack.c.b16 %v1706, %v1705
    %v2005 = vpack.c.b16 %v1708, %v1707
    %v2006 = vpack.c.b16 %v1710, %v1709
    %v2007 = vpack.c.b16 %v1712, %v1711
    %v2008 = vpack.c.b16 %v1714, %v1713
    %v2009 = vpack.c.b16 %v1716, %v1715
    %v2010 = vpack.c.b16 %v1718, %v1717
    %v2011 = vpack.c.b16 %v1720, %v1719
    %v2012 = vpack.c.b16 %v1722, %v1721
    %v2013 = vpack.c.b16 %v1724, %v1723
    %v2014 = vpack.c.b16 %v1726, %v1725
    %v2015 = vpack.c.b16 %v1728, %v1727
    %v2016 = vpack.c.b16 %v1730, %v1729
    %v2017 = vpack.c.b16 %v1732, %v1731
    %v2018 = vpack.c.b16 %v1734, %v1733
    %v2019 = vpack.c.b16 %v1736, %v1735
    %v2020 = vpack.c.b16 %v1738, %v1737
    %v2021 = vpack.c.b16 %v1740, %v1739
    %v2022 = vpack.c.b16 %v1742, %v1741
    %v2023 = vpack.c.b16 %v1744, %v1743
    %v2024 = vpack.c.b16 %v1746, %v1745
    %v2025 = vpack.c.b16 %v1748, %v1747
    %v2026 = vpack.c.b16 %v1750, %v1749
    %v2027 = vpack.c.b16 %v1752, %v1751
    %v2028 = vpack.c.b16 %v1754, %v1753
    %v2029 = vpack.c.b16 %v1756, %v1755
    %v2030 = vpack.c.b16 %v1758, %v1757
    %v2031 = vpack.c.b16 %v1760, %v1759
    %v2032 = vpack.c.b16 %v1762, %v1761
    %v2033 = vpack.c.b16 %v1764, %v1763
    %v2034 = vpack.c.b16 %v1766, %v1765
    %v2035 = vpack.c.b16 %v1768, %v1767
    %v2036 = vpack.c.b16 %v1770, %v1769
    %v2037 = vpack.c.b16 %v1772, %v1771
    %v2038 = vpack.c.b16 %v1774, %v1773
    %v2039 = vpack.c.b16 %v1776, %v1775
    %v2040 = vpack.c.b16 %v1778, %v1777
    %v2041 = vpack.c.b16 %v1780, %v1779
    %v2042 = vpack.c.b16 %v1782, %v1781
    %v2043 = vpack.c.b16 %v1784, %v1783
    %v2044 = vpack.c.b16 %v1786, %v1785
    %v2045 = vpack.c.b16 %v1788, %v1787
    %v2046 = vpack.c.b16 %v1790, %v1789
    %2303 = vmatprep.subr.bf16.mxu0 0
    %2304 = vmatpush1.bf16.msra.mxu0 %v1798
    %2305 = vmatprep.subr.bf16.mxu0 0
    %2306 = vmatpush1.bf16.msra.mxu0 %v1797
    %2307 = vmatprep.subr.bf16.mxu0 0
    %2308 = vmatpush1.bf16.msra.mxu0 %v1796
    %2309 = vmatprep.subr.bf16.mxu0 0
    %2310 = vmatpush1.bf16.msra.mxu0 %v1795
    %2311 = vmatprep.subr.bf16.mxu0 0
    %2312 = vmatpush1.bf16.msra.mxu0 %v1794
    %2313 = vmatprep.subr.bf16.mxu0 0
    %2314 = vmatpush1.bf16.msra.mxu0 %v1793
    %2315 = vmatprep.subr.bf16.mxu0 0
    %2316 = vmatpush1.bf16.msra.mxu0 %v1792
    %2317 = vmatprep.subr.bf16.mxu0 0
    %2318 = vmatpush1.bf16.msra.mxu0 %v1791
    %2319 = vmatprep.subr.bf16.mxu0 0
    %2320 = vmatpush2.bf16.msra.mxu0 %v1806
    %2321 = vmatprep.subr.bf16.mxu0 0
    %2322 = vmatpush2.bf16.msra.mxu0 %v1805
    %2323 = vmatprep.subr.bf16.mxu0 0
    %2324 = vmatpush2.bf16.msra.mxu0 %v1804
    %2325 = vmatprep.subr.bf16.mxu0 0
    %2326 = vmatpush2.bf16.msra.mxu0 %v1803
    %2327 = vmatprep.subr.bf16.mxu0 0
    %2328 = vmatpush2.bf16.msra.mxu0 %v1802
    %2329 = vmatprep.subr.bf16.mxu0 0
    %2330 = vmatpush2.bf16.msra.mxu0 %v1801
    %2331 = vmatprep.subr.bf16.mxu0 0
    %2332 = vmatpush2.bf16.msra.mxu0 %v1800
    %2333 = vmatprep.subr.bf16.mxu0 0
    %2334 = vmatpush2.bf16.msra.mxu0 %v1799
    %2335 = vmatprep.mubr.bf16.mxu0 %v224
    %2336 = vmatmul.mubr.bf16.gmra.mxu0 %v223
    %v2337 = vpop.f32.mrf.mxu0
    %v2338 = vadd.f32 0.0, %v2337
    %v2339 = vpop.f32.mrf.mxu0
    %v2340 = vpop.f32.mrf.mxu0
    %v2341 = vpop.f32.mrf.mxu0
    %2342 = vdwg.mxu0
    %2343 = vmatprep.subr.bf16.mxu0 0
    %2344 = vmatpush1.bf16.msra.mxu0 %v1814
    %2345 = vmatprep.subr.bf16.mxu0 0
    %2346 = vmatpush1.bf16.msra.mxu0 %v1813
    %2347 = vmatprep.subr.bf16.mxu0 0
    %2348 = vmatpush1.bf16.msra.mxu0 %v1812
    %2349 = vmatprep.subr.bf16.mxu0 0
    %2350 = vmatpush1.bf16.msra.mxu0 %v1811
    %2351 = vmatprep.subr.bf16.mxu0 0
    %2352 = vmatpush1.bf16.msra.mxu0 %v1810
    %2353 = vmatprep.subr.bf16.mxu0 0
    %2354 = vmatpush1.bf16.msra.mxu0 %v1809
    %2355 = vmatprep.subr.bf16.mxu0 0
    %2356 = vmatpush1.bf16.msra.mxu0 %v1808
    %2357 = vmatprep.subr.bf16.mxu0 0
    %2358 = vmatpush1.bf16.msra.mxu0 %v1807
    %2359 = vmatprep.subr.bf16.mxu0 0
    %2360 = vmatpush2.bf16.msra.mxu0 %v1822
    %2361 = vmatprep.subr.bf16.mxu0 0
    %2362 = vmatpush2.bf16.msra.mxu0 %v1821
    %2363 = vmatprep.subr.bf16.mxu0 0
    %2364 = vmatpush2.bf16.msra.mxu0 %v1820
    %2365 = vmatprep.subr.bf16.mxu0 0
    %2366 = vmatpush2.bf16.msra.mxu0 %v1819
    %2367 = vmatprep.subr.bf16.mxu0 0
    %2368 = vmatpush2.bf16.msra.mxu0 %v1818
    %2369 = vmatprep.subr.bf16.mxu0 0
    %2370 = vmatpush2.bf16.msra.mxu0 %v1817
    %2371 = vmatprep.subr.bf16.mxu0 0
    %2372 = vmatpush2.bf16.msra.mxu0 %v1816
    %2373 = vmatprep.subr.bf16.mxu0 0
    %2374 = vmatpush2.bf16.msra.mxu0 %v1815
    %2375 = vmatprep.mubr.bf16.mxu0 %v226
    %2376 = vmatmul.mubr.bf16.gmra.mxu0 %v225
    %v2377 = vpop.f32.mrf.mxu0
    %v2378 = vadd.f32 %v2338, %v2377
    %v2379 = vpop.f32.mrf.mxu0
    %v2380 = vpop.f32.mrf.mxu0
    %v2381 = vpop.f32.mrf.mxu0
    %2382 = vdwg.mxu0
    %2383 = vmatprep.subr.bf16.mxu0 0
    %2384 = vmatpush1.bf16.msra.mxu0 %v1830
    %2385 = vmatprep.subr.bf16.mxu0 0
    %2386 = vmatpush1.bf16.msra.mxu0 %v1829
    %2387 = vmatprep.subr.bf16.mxu0 0
    %2388 = vmatpush1.bf16.msra.mxu0 %v1828
    %2389 = vmatprep.subr.bf16.mxu0 0
    %2390 = vmatpush1.bf16.msra.mxu0 %v1827
    %2391 = vmatprep.subr.bf16.mxu0 0
    %2392 = vmatpush1.bf16.msra.mxu0 %v1826
    %2393 = vmatprep.subr.bf16.mxu0 0
    %2394 = vmatpush1.bf16.msra.mxu0 %v1825
    %2395 = vmatprep.subr.bf16.mxu0 0
    %2396 = vmatpush1.bf16.msra.mxu0 %v1824
    %2397 = vmatprep.subr.bf16.mxu0 0
    %2398 = vmatpush1.bf16.msra.mxu0 %v1823
    %2399 = vmatprep.subr.bf16.mxu0 0
    %2400 = vmatpush2.bf16.msra.mxu0 %v1838
    %2401 = vmatprep.subr.bf16.mxu0 0
    %2402 = vmatpush2.bf16.msra.mxu0 %v1837
    %2403 = vmatprep.subr.bf16.mxu0 0
    %2404 = vmatpush2.bf16.msra.mxu0 %v1836
    %2405 = vmatprep.subr.bf16.mxu0 0
    %2406 = vmatpush2.bf16.msra.mxu0 %v1835
    %2407 = vmatprep.subr.bf16.mxu0 0
    %2408 = vmatpush2.bf16.msra.mxu0 %v1834
    %2409 = vmatprep.subr.bf16.mxu0 0
    %2410 = vmatpush2.bf16.msra.mxu0 %v1833
    %2411 = vmatprep.subr.bf16.mxu0 0
    %2412 = vmatpush2.bf16.msra.mxu0 %v1832
    %2413 = vmatprep.subr.bf16.mxu0 0
    %2414 = vmatpush2.bf16.msra.mxu0 %v1831
    %2415 = vmatprep.mubr.bf16.mxu0 %v228
    %2416 = vmatmul.mubr.bf16.gmra.mxu0 %v227
    %v2417 = vpop.f32.mrf.mxu0
    %v2418 = vadd.f32 %v2378, %v2417
    %v2419 = vpop.f32.mrf.mxu0
    %v2420 = vpop.f32.mrf.mxu0
    %v2421 = vpop.f32.mrf.mxu0
    %2422 = vdwg.mxu0
    %2423 = vmatprep.subr.bf16.mxu0 0
    %2424 = vmatpush1.bf16.msra.mxu0 %v1846
    %2425 = vmatprep.subr.bf16.mxu0 0
    %2426 = vmatpush1.bf16.msra.mxu0 %v1845
    %2427 = vmatprep.subr.bf16.mxu0 0
    %2428 = vmatpush1.bf16.msra.mxu0 %v1844
    %2429 = vmatprep.subr.bf16.mxu0 0
    %2430 = vmatpush1.bf16.msra.mxu0 %v1843
    %2431 = vmatprep.subr.bf16.mxu0 0
    %2432 = vmatpush1.bf16.msra.mxu0 %v1842
    %2433 = vmatprep.subr.bf16.mxu0 0
    %2434 = vmatpush1.bf16.msra.mxu0 %v1841
    %2435 = vmatprep.subr.bf16.mxu0 0
    %2436 = vmatpush1.bf16.msra.mxu0 %v1840
    %2437 = vmatprep.subr.bf16.mxu0 0
    %2438 = vmatpush1.bf16.msra.mxu0 %v1839
    %2439 = vmatprep.subr.bf16.mxu0 0
    %2440 = vmatpush2.bf16.msra.mxu0 %v1854
    %2441 = vmatprep.subr.bf16.mxu0 0
    %2442 = vmatpush2.bf16.msra.mxu0 %v1853
    %2443 = vmatprep.subr.bf16.mxu0 0
    %2444 = vmatpush2.bf16.msra.mxu0 %v1852
    %2445 = vmatprep.subr.bf16.mxu0 0
    %2446 = vmatpush2.bf16.msra.mxu0 %v1851
    %2447 = vmatprep.subr.bf16.mxu0 0
    %2448 = vmatpush2.bf16.msra.mxu0 %v1850
    %2449 = vmatprep.subr.bf16.mxu0 0
    %2450 = vmatpush2.bf16.msra.mxu0 %v1849
    %2451 = vmatprep.subr.bf16.mxu0 0
    %2452 = vmatpush2.bf16.msra.mxu0 %v1848
    %2453 = vmatprep.subr.bf16.mxu0 0
    %2454 = vmatpush2.bf16.msra.mxu0 %v1847
    %2455 = vmatprep.mubr.bf16.mxu0 %v230
    %2456 = vmatmul.mubr.bf16.gmra.mxu0 %v229
    %v2457 = vpop.f32.mrf.mxu0
    %v2458 = vadd.f32 %v2418, %v2457
    %v2459 = vpop.f32.mrf.mxu0
    %v2460 = vpop.f32.mrf.mxu0
    %v2461 = vpop.f32.mrf.mxu0
    %2462 = vdwg.mxu0
    %2463 = vmatprep.subr.bf16.mxu0 0
    %2464 = vmatpush1.bf16.msra.mxu0 %v1862
    %2465 = vmatprep.subr.bf16.mxu0 0
    %2466 = vmatpush1.bf16.msra.mxu0 %v1861
    %2467 = vmatprep.subr.bf16.mxu0 0
    %2468 = vmatpush1.bf16.msra.mxu0 %v1860
    %2469 = vmatprep.subr.bf16.mxu0 0
    %2470 = vmatpush1.bf16.msra.mxu0 %v1859
    %2471 = vmatprep.subr.bf16.mxu0 0
    %2472 = vmatpush1.bf16.msra.mxu0 %v1858
    %2473 = vmatprep.subr.bf16.mxu0 0
    %2474 = vmatpush1.bf16.msra.mxu0 %v1857
    %2475 = vmatprep.subr.bf16.mxu0 0
    %2476 = vmatpush1.bf16.msra.mxu0 %v1856
    %2477 = vmatprep.subr.bf16.mxu0 0
    %2478 = vmatpush1.bf16.msra.mxu0 %v1855
    %2479 = vmatprep.subr.bf16.mxu0 0
    %2480 = vmatpush2.bf16.msra.mxu0 %v1870
    %2481 = vmatprep.subr.bf16.mxu0 0
    %2482 = vmatpush2.bf16.msra.mxu0 %v1869
    %2483 = vmatprep.subr.bf16.mxu0 0
    %2484 = vmatpush2.bf16.msra.mxu0 %v1868
    %2485 = vmatprep.subr.bf16.mxu0 0
    %2486 = vmatpush2.bf16.msra.mxu0 %v1867
    %2487 = vmatprep.subr.bf16.mxu0 0
    %2488 = vmatpush2.bf16.msra.mxu0 %v1866
    %2489 = vmatprep.subr.bf16.mxu0 0
    %2490 = vmatpush2.bf16.msra.mxu0 %v1865
    %2491 = vmatprep.subr.bf16.mxu0 0
    %2492 = vmatpush2.bf16.msra.mxu0 %v1864
    %2493 = vmatprep.subr.bf16.mxu0 0
    %2494 = vmatpush2.bf16.msra.mxu0 %v1863
    %2495 = vmatprep.mubr.bf16.mxu0 %v232
    %2496 = vmatmul.mubr.bf16.gmra.mxu0 %v231
    %v2497 = vpop.f32.mrf.mxu0
    %v2498 = vadd.f32 %v2458, %v2497
    %v2499 = vpop.f32.mrf.mxu0
    %v2500 = vpop.f32.mrf.mxu0
    %v2501 = vpop.f32.mrf.mxu0
    %2502 = vdwg.mxu0
    %2503 = vmatprep.subr.bf16.mxu0 0
    %2504 = vmatpush1.bf16.msra.mxu0 %v1878
    %2505 = vmatprep.subr.bf16.mxu0 0
    %2506 = vmatpush1.bf16.msra.mxu0 %v1877
    %2507 = vmatprep.subr.bf16.mxu0 0
    %2508 = vmatpush1.bf16.msra.mxu0 %v1876
    %2509 = vmatprep.subr.bf16.mxu0 0
    %2510 = vmatpush1.bf16.msra.mxu0 %v1875
    %2511 = vmatprep.subr.bf16.mxu0 0
    %2512 = vmatpush1.bf16.msra.mxu0 %v1874
    %2513 = vmatprep.subr.bf16.mxu0 0
    %2514 = vmatpush1.bf16.msra.mxu0 %v1873
    %2515 = vmatprep.subr.bf16.mxu0 0
    %2516 = vmatpush1.bf16.msra.mxu0 %v1872
    %2517 = vmatprep.subr.bf16.mxu0 0
    %2518 = vmatpush1.bf16.msra.mxu0 %v1871
    %2519 = vmatprep.subr.bf16.mxu0 0
    %2520 = vmatpush2.bf16.msra.mxu0 %v1886
    %2521 = vmatprep.subr.bf16.mxu0 0
    %2522 = vmatpush2.bf16.msra.mxu0 %v1885
    %2523 = vmatprep.subr.bf16.mxu0 0
    %2524 = vmatpush2.bf16.msra.mxu0 %v1884
    %2525 = vmatprep.subr.bf16.mxu0 0
    %2526 = vmatpush2.bf16.msra.mxu0 %v1883
    %2527 = vmatprep.subr.bf16.mxu0 0
    %2528 = vmatpush2.bf16.msra.mxu0 %v1882
    %2529 = vmatprep.subr.bf16.mxu0 0
    %2530 = vmatpush2.bf16.msra.mxu0 %v1881
    %2531 = vmatprep.subr.bf16.mxu0 0
    %2532 = vmatpush2.bf16.msra.mxu0 %v1880
    %2533 = vmatprep.subr.bf16.mxu0 0
    %2534 = vmatpush2.bf16.msra.mxu0 %v1879
    %2535 = vmatprep.mubr.bf16.mxu0 %v234
    %2536 = vmatmul.mubr.bf16.gmra.mxu0 %v233
    %v2537 = vpop.f32.mrf.mxu0
    %v2538 = vadd.f32 %v2498, %v2537
    %v2539 = vpop.f32.mrf.mxu0
    %v2540 = vpop.f32.mrf.mxu0
    %v2541 = vpop.f32.mrf.mxu0
    %2542 = vdwg.mxu0
    %2543 = vmatprep.subr.bf16.mxu0 0
    %2544 = vmatpush1.bf16.msra.mxu0 %v1894
    %2545 = vmatprep.subr.bf16.mxu0 0
    %2546 = vmatpush1.bf16.msra.mxu0 %v1893
    %2547 = vmatprep.subr.bf16.mxu0 0
    %2548 = vmatpush1.bf16.msra.mxu0 %v1892
    %2549 = vmatprep.subr.bf16.mxu0 0
    %2550 = vmatpush1.bf16.msra.mxu0 %v1891
    %2551 = vmatprep.subr.bf16.mxu0 0
    %2552 = vmatpush1.bf16.msra.mxu0 %v1890
    %2553 = vmatprep.subr.bf16.mxu0 0
    %2554 = vmatpush1.bf16.msra.mxu0 %v1889
    %2555 = vmatprep.subr.bf16.mxu0 0
    %2556 = vmatpush1.bf16.msra.mxu0 %v1888
    %2557 = vmatprep.subr.bf16.mxu0 0
    %2558 = vmatpush1.bf16.msra.mxu0 %v1887
    %2559 = vmatprep.subr.bf16.mxu0 0
    %2560 = vmatpush2.bf16.msra.mxu0 %v1902
    %2561 = vmatprep.subr.bf16.mxu0 0
    %2562 = vmatpush2.bf16.msra.mxu0 %v1901
    %2563 = vmatprep.subr.bf16.mxu0 0
    %2564 = vmatpush2.bf16.msra.mxu0 %v1900
    %2565 = vmatprep.subr.bf16.mxu0 0
    %2566 = vmatpush2.bf16.msra.mxu0 %v1899
    %2567 = vmatprep.subr.bf16.mxu0 0
    %2568 = vmatpush2.bf16.msra.mxu0 %v1898
    %2569 = vmatprep.subr.bf16.mxu0 0
    %2570 = vmatpush2.bf16.msra.mxu0 %v1897
    %2571 = vmatprep.subr.bf16.mxu0 0
    %2572 = vmatpush2.bf16.msra.mxu0 %v1896
    %2573 = vmatprep.subr.bf16.mxu0 0
    %2574 = vmatpush2.bf16.msra.mxu0 %v1895
    %2575 = vmatprep.mubr.bf16.mxu0 %v236
    %2576 = vmatmul.mubr.bf16.gmra.mxu0 %v235
    %v2577 = vpop.f32.mrf.mxu0
    %v2578 = vadd.f32 %v2538, %v2577
    %v2579 = vpop.f32.mrf.mxu0
    %v2580 = vpop.f32.mrf.mxu0
    %v2581 = vpop.f32.mrf.mxu0
    %2582 = vdwg.mxu0
    %2583 = vmatprep.subr.bf16.mxu0 0
    %2584 = vmatpush1.bf16.msra.mxu0 %v1910
    %2585 = vmatprep.subr.bf16.mxu0 0
    %2586 = vmatpush1.bf16.msra.mxu0 %v1909
    %2587 = vmatprep.subr.bf16.mxu0 0
    %2588 = vmatpush1.bf16.msra.mxu0 %v1908
    %2589 = vmatprep.subr.bf16.mxu0 0
    %2590 = vmatpush1.bf16.msra.mxu0 %v1907
    %2591 = vmatprep.subr.bf16.mxu0 0
    %2592 = vmatpush1.bf16.msra.mxu0 %v1906
    %2593 = vmatprep.subr.bf16.mxu0 0
    %2594 = vmatpush1.bf16.msra.mxu0 %v1905
    %2595 = vmatprep.subr.bf16.mxu0 0
    %2596 = vmatpush1.bf16.msra.mxu0 %v1904
    %2597 = vmatprep.subr.bf16.mxu0 0
    %2598 = vmatpush1.bf16.msra.mxu0 %v1903
    %2599 = vmatprep.subr.bf16.mxu0 0
    %2600 = vmatpush2.bf16.msra.mxu0 %v1918
    %2601 = vmatprep.subr.bf16.mxu0 0
    %2602 = vmatpush2.bf16.msra.mxu0 %v1917
    %2603 = vmatprep.subr.bf16.mxu0 0
    %2604 = vmatpush2.bf16.msra.mxu0 %v1916
    %2605 = vmatprep.subr.bf16.mxu0 0
    %2606 = vmatpush2.bf16.msra.mxu0 %v1915
    %2607 = vmatprep.subr.bf16.mxu0 0
    %2608 = vmatpush2.bf16.msra.mxu0 %v1914
    %2609 = vmatprep.subr.bf16.mxu0 0
    %2610 = vmatpush2.bf16.msra.mxu0 %v1913
    %2611 = vmatprep.subr.bf16.mxu0 0
    %2612 = vmatpush2.bf16.msra.mxu0 %v1912
    %2613 = vmatprep.subr.bf16.mxu0 0
    %2614 = vmatpush2.bf16.msra.mxu0 %v1911
    %2615 = vmatprep.mubr.bf16.mxu0 %v238
    %2616 = vmatmul.mubr.bf16.gmra.mxu0 %v237
    %v2617 = vpop.f32.mrf.mxu0
    %v2618 = vadd.f32 %v2578, %v2617
    %v2619 = vpop.f32.mrf.mxu0
    %v2620 = vpop.f32.mrf.mxu0
    %v2621 = vpop.f32.mrf.mxu0
    %2622 = vdwg.mxu0
    %2623 = vmatprep.subr.bf16.mxu0 0
    %2624 = vmatpush1.bf16.msra.mxu0 %v1926
    %2625 = vmatprep.subr.bf16.mxu0 0
    %2626 = vmatpush1.bf16.msra.mxu0 %v1925
    %2627 = vmatprep.subr.bf16.mxu0 0
    %2628 = vmatpush1.bf16.msra.mxu0 %v1924
    %2629 = vmatprep.subr.bf16.mxu0 0
    %2630 = vmatpush1.bf16.msra.mxu0 %v1923
    %2631 = vmatprep.subr.bf16.mxu0 0
    %2632 = vmatpush1.bf16.msra.mxu0 %v1922
    %2633 = vmatprep.subr.bf16.mxu0 0
    %2634 = vmatpush1.bf16.msra.mxu0 %v1921
    %2635 = vmatprep.subr.bf16.mxu0 0
    %2636 = vmatpush1.bf16.msra.mxu0 %v1920
    %2637 = vmatprep.subr.bf16.mxu0 0
    %2638 = vmatpush1.bf16.msra.mxu0 %v1919
    %2639 = vmatprep.subr.bf16.mxu0 0
    %2640 = vmatpush2.bf16.msra.mxu0 %v1934
    %2641 = vmatprep.subr.bf16.mxu0 0
    %2642 = vmatpush2.bf16.msra.mxu0 %v1933
    %2643 = vmatprep.subr.bf16.mxu0 0
    %2644 = vmatpush2.bf16.msra.mxu0 %v1932
    %2645 = vmatprep.subr.bf16.mxu0 0
    %2646 = vmatpush2.bf16.msra.mxu0 %v1931
    %2647 = vmatprep.subr.bf16.mxu0 0
    %2648 = vmatpush2.bf16.msra.mxu0 %v1930
    %2649 = vmatprep.subr.bf16.mxu0 0
    %2650 = vmatpush2.bf16.msra.mxu0 %v1929
    %2651 = vmatprep.subr.bf16.mxu0 0
    %2652 = vmatpush2.bf16.msra.mxu0 %v1928
    %2653 = vmatprep.subr.bf16.mxu0 0
    %2654 = vmatpush2.bf16.msra.mxu0 %v1927
    %2655 = vmatprep.mubr.bf16.mxu0 %v240
    %2656 = vmatmul.mubr.bf16.gmra.mxu0 %v239
    %v2657 = vpop.f32.mrf.mxu0
    %v2658 = vadd.f32 %v2618, %v2657
    %v2659 = vpop.f32.mrf.mxu0
    %v2660 = vpop.f32.mrf.mxu0
    %v2661 = vpop.f32.mrf.mxu0
    %2662 = vdwg.mxu0
    %2663 = vmatprep.subr.bf16.mxu0 0
    %2664 = vmatpush1.bf16.msra.mxu0 %v1942
    %2665 = vmatprep.subr.bf16.mxu0 0
    %2666 = vmatpush1.bf16.msra.mxu0 %v1941
    %2667 = vmatprep.subr.bf16.mxu0 0
    %2668 = vmatpush1.bf16.msra.mxu0 %v1940
    %2669 = vmatprep.subr.bf16.mxu0 0
    %2670 = vmatpush1.bf16.msra.mxu0 %v1939
    %2671 = vmatprep.subr.bf16.mxu0 0
    %2672 = vmatpush1.bf16.msra.mxu0 %v1938
    %2673 = vmatprep.subr.bf16.mxu0 0
    %2674 = vmatpush1.bf16.msra.mxu0 %v1937
    %2675 = vmatprep.subr.bf16.mxu0 0
    %2676 = vmatpush1.bf16.msra.mxu0 %v1936
    %2677 = vmatprep.subr.bf16.mxu0 0
    %2678 = vmatpush1.bf16.msra.mxu0 %v1935
    %2679 = vmatprep.subr.bf16.mxu0 0
    %2680 = vmatpush2.bf16.msra.mxu0 %v1950
    %2681 = vmatprep.subr.bf16.mxu0 0
    %2682 = vmatpush2.bf16.msra.mxu0 %v1949
    %2683 = vmatprep.subr.bf16.mxu0 0
    %2684 = vmatpush2.bf16.msra.mxu0 %v1948
    %2685 = vmatprep.subr.bf16.mxu0 0
    %2686 = vmatpush2.bf16.msra.mxu0 %v1947
    %2687 = vmatprep.subr.bf16.mxu0 0
    %2688 = vmatpush2.bf16.msra.mxu0 %v1946
    %2689 = vmatprep.subr.bf16.mxu0 0
    %2690 = vmatpush2.bf16.msra.mxu0 %v1945
    %2691 = vmatprep.subr.bf16.mxu0 0
    %2692 = vmatpush2.bf16.msra.mxu0 %v1944
    %2693 = vmatprep.subr.bf16.mxu0 0
    %2694 = vmatpush2.bf16.msra.mxu0 %v1943
    %2695 = vmatprep.mubr.bf16.mxu0 %v242
    %2696 = vmatmul.mubr.bf16.gmra.mxu0 %v241
    %v2697 = vpop.f32.mrf.mxu0
    %v2698 = vadd.f32 %v2658, %v2697
    %v2699 = vpop.f32.mrf.mxu0
    %v2700 = vpop.f32.mrf.mxu0
    %v2701 = vpop.f32.mrf.mxu0
    %2702 = vdwg.mxu0
    %2703 = vmatprep.subr.bf16.mxu0 0
    %2704 = vmatpush1.bf16.msra.mxu0 %v1958
    %2705 = vmatprep.subr.bf16.mxu0 0
    %2706 = vmatpush1.bf16.msra.mxu0 %v1957
    %2707 = vmatprep.subr.bf16.mxu0 0
    %2708 = vmatpush1.bf16.msra.mxu0 %v1956
    %2709 = vmatprep.subr.bf16.mxu0 0
    %2710 = vmatpush1.bf16.msra.mxu0 %v1955
    %2711 = vmatprep.subr.bf16.mxu0 0
    %2712 = vmatpush1.bf16.msra.mxu0 %v1954
    %2713 = vmatprep.subr.bf16.mxu0 0
    %2714 = vmatpush1.bf16.msra.mxu0 %v1953
    %2715 = vmatprep.subr.bf16.mxu0 0
    %2716 = vmatpush1.bf16.msra.mxu0 %v1952
    %2717 = vmatprep.subr.bf16.mxu0 0
    %2718 = vmatpush1.bf16.msra.mxu0 %v1951
    %2719 = vmatprep.subr.bf16.mxu0 0
    %2720 = vmatpush2.bf16.msra.mxu0 %v1966
    %2721 = vmatprep.subr.bf16.mxu0 0
    %2722 = vmatpush2.bf16.msra.mxu0 %v1965
    %2723 = vmatprep.subr.bf16.mxu0 0
    %2724 = vmatpush2.bf16.msra.mxu0 %v1964
    %2725 = vmatprep.subr.bf16.mxu0 0
    %2726 = vmatpush2.bf16.msra.mxu0 %v1963
    %2727 = vmatprep.subr.bf16.mxu0 0
    %2728 = vmatpush2.bf16.msra.mxu0 %v1962
    %2729 = vmatprep.subr.bf16.mxu0 0
    %2730 = vmatpush2.bf16.msra.mxu0 %v1961
    %2731 = vmatprep.subr.bf16.mxu0 0
    %2732 = vmatpush2.bf16.msra.mxu0 %v1960
    %2733 = vmatprep.subr.bf16.mxu0 0
    %2734 = vmatpush2.bf16.msra.mxu0 %v1959
    %2735 = vmatprep.mubr.bf16.mxu0 %v244
    %2736 = vmatmul.mubr.bf16.gmra.mxu0 %v243
    %v2737 = vpop.f32.mrf.mxu0
    %v2738 = vadd.f32 %v2698, %v2737
    %v2739 = vpop.f32.mrf.mxu0
    %v2740 = vpop.f32.mrf.mxu0
    %v2741 = vpop.f32.mrf.mxu0
    %2742 = vdwg.mxu0
    %2743 = vmatprep.subr.bf16.mxu0 0
    %2744 = vmatpush1.bf16.msra.mxu0 %v1974
    %2745 = vmatprep.subr.bf16.mxu0 0
    %2746 = vmatpush1.bf16.msra.mxu0 %v1973
    %2747 = vmatprep.subr.bf16.mxu0 0
    %2748 = vmatpush1.bf16.msra.mxu0 %v1972
    %2749 = vmatprep.subr.bf16.mxu0 0
    %2750 = vmatpush1.bf16.msra.mxu0 %v1971
    %2751 = vmatprep.subr.bf16.mxu0 0
    %2752 = vmatpush1.bf16.msra.mxu0 %v1970
    %2753 = vmatprep.subr.bf16.mxu0 0
    %2754 = vmatpush1.bf16.msra.mxu0 %v1969
    %2755 = vmatprep.subr.bf16.mxu0 0
    %2756 = vmatpush1.bf16.msra.mxu0 %v1968
    %2757 = vmatprep.subr.bf16.mxu0 0
    %2758 = vmatpush1.bf16.msra.mxu0 %v1967
    %2759 = vmatprep.subr.bf16.mxu0 0
    %2760 = vmatpush2.bf16.msra.mxu0 %v1982
    %2761 = vmatprep.subr.bf16.mxu0 0
    %2762 = vmatpush2.bf16.msra.mxu0 %v1981
    %2763 = vmatprep.subr.bf16.mxu0 0
    %2764 = vmatpush2.bf16.msra.mxu0 %v1980
    %2765 = vmatprep.subr.bf16.mxu0 0
    %2766 = vmatpush2.bf16.msra.mxu0 %v1979
    %2767 = vmatprep.subr.bf16.mxu0 0
    %2768 = vmatpush2.bf16.msra.mxu0 %v1978
    %2769 = vmatprep.subr.bf16.mxu0 0
    %2770 = vmatpush2.bf16.msra.mxu0 %v1977
    %2771 = vmatprep.subr.bf16.mxu0 0
    %2772 = vmatpush2.bf16.msra.mxu0 %v1976
    %2773 = vmatprep.subr.bf16.mxu0 0
    %2774 = vmatpush2.bf16.msra.mxu0 %v1975
    %2775 = vmatprep.mubr.bf16.mxu0 %v246
    %2776 = vmatmul.mubr.bf16.gmra.mxu0 %v245
    %v2777 = vpop.f32.mrf.mxu0
    %v2778 = vadd.f32 %v2738, %v2777
    %v2779 = vpop.f32.mrf.mxu0
    %v2780 = vpop.f32.mrf.mxu0
    %v2781 = vpop.f32.mrf.mxu0
    %2782 = vdwg.mxu0
    %2783 = vmatprep.subr.bf16.mxu0 0
    %2784 = vmatpush1.bf16.msra.mxu0 %v1990
    %2785 = vmatprep.subr.bf16.mxu0 0
    %2786 = vmatpush1.bf16.msra.mxu0 %v1989
    %2787 = vmatprep.subr.bf16.mxu0 0
    %2788 = vmatpush1.bf16.msra.mxu0 %v1988
    %2789 = vmatprep.subr.bf16.mxu0 0
    %2790 = vmatpush1.bf16.msra.mxu0 %v1987
    %2791 = vmatprep.subr.bf16.mxu0 0
    %2792 = vmatpush1.bf16.msra.mxu0 %v1986
    %2793 = vmatprep.subr.bf16.mxu0 0
    %2794 = vmatpush1.bf16.msra.mxu0 %v1985
    %2795 = vmatprep.subr.bf16.mxu0 0
    %2796 = vmatpush1.bf16.msra.mxu0 %v1984
    %2797 = vmatprep.subr.bf16.mxu0 0
    %2798 = vmatpush1.bf16.msra.mxu0 %v1983
    %2799 = vmatprep.subr.bf16.mxu0 0
    %2800 = vmatpush2.bf16.msra.mxu0 %v1998
    %2801 = vmatprep.subr.bf16.mxu0 0
    %2802 = vmatpush2.bf16.msra.mxu0 %v1997
    %2803 = vmatprep.subr.bf16.mxu0 0
    %2804 = vmatpush2.bf16.msra.mxu0 %v1996
    %2805 = vmatprep.subr.bf16.mxu0 0
    %2806 = vmatpush2.bf16.msra.mxu0 %v1995
    %2807 = vmatprep.subr.bf16.mxu0 0
    %2808 = vmatpush2.bf16.msra.mxu0 %v1994
    %2809 = vmatprep.subr.bf16.mxu0 0
    %2810 = vmatpush2.bf16.msra.mxu0 %v1993
    %2811 = vmatprep.subr.bf16.mxu0 0
    %2812 = vmatpush2.bf16.msra.mxu0 %v1992
    %2813 = vmatprep.subr.bf16.mxu0 0
    %2814 = vmatpush2.bf16.msra.mxu0 %v1991
    %2815 = vmatprep.mubr.bf16.mxu0 %v248
    %2816 = vmatmul.mubr.bf16.gmra.mxu0 %v247
    %v2817 = vpop.f32.mrf.mxu0
    %v2818 = vadd.f32 %v2778, %v2817
    %v2819 = vpop.f32.mrf.mxu0
    %v2820 = vpop.f32.mrf.mxu0
    %v2821 = vpop.f32.mrf.mxu0
    %2822 = vdwg.mxu0
    %2823 = vmatprep.subr.bf16.mxu0 0
    %2824 = vmatpush1.bf16.msra.mxu0 %v2006
    %2825 = vmatprep.subr.bf16.mxu0 0
    %2826 = vmatpush1.bf16.msra.mxu0 %v2005
    %2827 = vmatprep.subr.bf16.mxu0 0
    %2828 = vmatpush1.bf16.msra.mxu0 %v2004
    %2829 = vmatprep.subr.bf16.mxu0 0
    %2830 = vmatpush1.bf16.msra.mxu0 %v2003
    %2831 = vmatprep.subr.bf16.mxu0 0
    %2832 = vmatpush1.bf16.msra.mxu0 %v2002
    %2833 = vmatprep.subr.bf16.mxu0 0
    %2834 = vmatpush1.bf16.msra.mxu0 %v2001
    %2835 = vmatprep.subr.bf16.mxu0 0
    %2836 = vmatpush1.bf16.msra.mxu0 %v2000
    %2837 = vmatprep.subr.bf16.mxu0 0
    %2838 = vmatpush1.bf16.msra.mxu0 %v1999
    %2839 = vmatprep.subr.bf16.mxu0 0
    %2840 = vmatpush2.bf16.msra.mxu0 %v2014
    %2841 = vmatprep.subr.bf16.mxu0 0
    %2842 = vmatpush2.bf16.msra.mxu0 %v2013
    %2843 = vmatprep.subr.bf16.mxu0 0
    %2844 = vmatpush2.bf16.msra.mxu0 %v2012
    %2845 = vmatprep.subr.bf16.mxu0 0
    %2846 = vmatpush2.bf16.msra.mxu0 %v2011
    %2847 = vmatprep.subr.bf16.mxu0 0
    %2848 = vmatpush2.bf16.msra.mxu0 %v2010
    %2849 = vmatprep.subr.bf16.mxu0 0
    %2850 = vmatpush2.bf16.msra.mxu0 %v2009
    %2851 = vmatprep.subr.bf16.mxu0 0
    %2852 = vmatpush2.bf16.msra.mxu0 %v2008
    %2853 = vmatprep.subr.bf16.mxu0 0
    %2854 = vmatpush2.bf16.msra.mxu0 %v2007
    %2855 = vmatprep.mubr.bf16.mxu0 %v250
    %2856 = vmatmul.mubr.bf16.gmra.mxu0 %v249
    %v2857 = vpop.f32.mrf.mxu0
    %v2858 = vadd.f32 %v2818, %v2857
    %v2859 = vpop.f32.mrf.mxu0
    %v2860 = vpop.f32.mrf.mxu0
    %v2861 = vpop.f32.mrf.mxu0
    %2862 = vdwg.mxu0
    %2863 = vmatprep.subr.bf16.mxu0 0
    %2864 = vmatpush1.bf16.msra.mxu0 %v2022
    %2865 = vmatprep.subr.bf16.mxu0 0
    %2866 = vmatpush1.bf16.msra.mxu0 %v2021
    %2867 = vmatprep.subr.bf16.mxu0 0
    %2868 = vmatpush1.bf16.msra.mxu0 %v2020
    %2869 = vmatprep.subr.bf16.mxu0 0
    %2870 = vmatpush1.bf16.msra.mxu0 %v2019
    %2871 = vmatprep.subr.bf16.mxu0 0
    %2872 = vmatpush1.bf16.msra.mxu0 %v2018
    %2873 = vmatprep.subr.bf16.mxu0 0
    %2874 = vmatpush1.bf16.msra.mxu0 %v2017
    %2875 = vmatprep.subr.bf16.mxu0 0
    %2876 = vmatpush1.bf16.msra.mxu0 %v2016
    %2877 = vmatprep.subr.bf16.mxu0 0
    %2878 = vmatpush1.bf16.msra.mxu0 %v2015
    %2879 = vmatprep.subr.bf16.mxu0 0
    %2880 = vmatpush2.bf16.msra.mxu0 %v2030
    %2881 = vmatprep.subr.bf16.mxu0 0
    %2882 = vmatpush2.bf16.msra.mxu0 %v2029
    %2883 = vmatprep.subr.bf16.mxu0 0
    %2884 = vmatpush2.bf16.msra.mxu0 %v2028
    %2885 = vmatprep.subr.bf16.mxu0 0
    %2886 = vmatpush2.bf16.msra.mxu0 %v2027
    %2887 = vmatprep.subr.bf16.mxu0 0
    %2888 = vmatpush2.bf16.msra.mxu0 %v2026
    %2889 = vmatprep.subr.bf16.mxu0 0
    %2890 = vmatpush2.bf16.msra.mxu0 %v2025
    %2891 = vmatprep.subr.bf16.mxu0 0
    %2892 = vmatpush2.bf16.msra.mxu0 %v2024
    %2893 = vmatprep.subr.bf16.mxu0 0
    %2894 = vmatpush2.bf16.msra.mxu0 %v2023
    %2895 = vmatprep.mubr.bf16.mxu0 %v252
    %2896 = vmatmul.mubr.bf16.gmra.mxu0 %v251
    %v2897 = vpop.f32.mrf.mxu0
    %v2898 = vadd.f32 %v2858, %v2897
    %v2899 = vpop.f32.mrf.mxu0
    %v2900 = vpop.f32.mrf.mxu0
    %v2901 = vpop.f32.mrf.mxu0
    %2902 = vdwg.mxu0
    %2903 = vmatprep.subr.bf16.mxu0 0
    %2904 = vmatpush1.bf16.msra.mxu0 %v2038
    %2905 = vmatprep.subr.bf16.mxu0 0
    %2906 = vmatpush1.bf16.msra.mxu0 %v2037
    %2907 = vmatprep.subr.bf16.mxu0 0
    %2908 = vmatpush1.bf16.msra.mxu0 %v2036
    %2909 = vmatprep.subr.bf16.mxu0 0
    %2910 = vmatpush1.bf16.msra.mxu0 %v2035
    %2911 = vmatprep.subr.bf16.mxu0 0
    %2912 = vmatpush1.bf16.msra.mxu0 %v2034
    %2913 = vmatprep.subr.bf16.mxu0 0
    %2914 = vmatpush1.bf16.msra.mxu0 %v2033
    %2915 = vmatprep.subr.bf16.mxu0 0
    %2916 = vmatpush1.bf16.msra.mxu0 %v2032
    %2917 = vmatprep.subr.bf16.mxu0 0
    %2918 = vmatpush1.bf16.msra.mxu0 %v2031
    %2919 = vmatprep.subr.bf16.mxu0 0
    %2920 = vmatpush2.bf16.msra.mxu0 %v2046
    %2921 = vmatprep.subr.bf16.mxu0 0
    %2922 = vmatpush2.bf16.msra.mxu0 %v2045
    %2923 = vmatprep.subr.bf16.mxu0 0
    %2924 = vmatpush2.bf16.msra.mxu0 %v2044
    %2925 = vmatprep.subr.bf16.mxu0 0
    %2926 = vmatpush2.bf16.msra.mxu0 %v2043
    %2927 = vmatprep.subr.bf16.mxu0 0
    %2928 = vmatpush2.bf16.msra.mxu0 %v2042
    %2929 = vmatprep.subr.bf16.mxu0 0
    %2930 = vmatpush2.bf16.msra.mxu0 %v2041
    %2931 = vmatprep.subr.bf16.mxu0 0
    %2932 = vmatpush2.bf16.msra.mxu0 %v2040
    %2933 = vmatprep.subr.bf16.mxu0 0
    %2934 = vmatpush2.bf16.msra.mxu0 %v2039
    %2935 = vmatprep.mubr.bf16.mxu0 %v254
    %2936 = vmatmul.mubr.bf16.gmra.mxu0 %v253
    %v2937 = vpop.f32.mrf.mxu0
    %v2938 = vadd.f32 %v2898, %v2937
    %v2939 = vpop.f32.mrf.mxu0
    %v2940 = vpop.f32.mrf.mxu0
    %v2941 = vpop.f32.mrf.mxu0
    %2942 = vdwg.mxu0
    %v2943 = vxor.u32 %v2938, 2147483648
    %v2944 = vmul.f32 %v2943, 1.442695
    %v2945 = vpow.pop %v2944
    %v2946 = vadd.f32 %v2945, 1.0
    %v2947 = vrcp.pop %v2946
    %v2948 = vmul.f32 1.0, %v2947
    %2949 = vst [vmem:[#allocation7] sm:$0x3] %v2948
    // Predicated region
    $region18: #{tpu_custom_call.1} parent=1 // pred_check
      _
    $region19: #{tpu_custom_call.1} parent=1 // pred_check_branch
      %2951 = sbr.rel (0) target = $region21
    $region20: #{tpu_custom_call.1} parent=1 // pred_region
      %s2953 = ssub.s32 32, 32
      %2954 = vsyncadd [#allocation4], %s2953
      %s2956 = sshll.u32 [#allocation7], 4
      %s2957 = int_to_ptr.vmem [resolvable:$true] %s2956
      %2959 = dma.vmem_to_hbm [thread:$0]  %s2957, 32, %s2, [#allocation4]
    $region21: #{tpu_custom_call.1} parent=1 // pred_fallthru
      _
    // Predicated region
    $region22: #{tpu_custom_call.1} parent=1 // pred_check
      _
    $region23: #{tpu_custom_call.1} parent=1 // pred_check_branch
      %2961 = sbr.rel (0) target = $region25
    $region24: #{tpu_custom_call.1} parent=1 // pred_region
      %2962 = dma.done [#allocation4], 32
    $region25: #{tpu_custom_call.1} parent=1 // pred_fallthru
      _
    %2963 = vsyncpa [#allocation3], 1
    %2964 = vsyncpa [#allocation6], 1
    %2965 = vsyncpa [#allocation4], 1

</llo_original>
